<compile_context>
chip_gen: v7x
topology: tpu7x:2x2x1
jax: 0.10.0
libtpu: 0.0.40
codegen_flags: <defaults>
</compile_context>

<pallas_src>
import jax
import jax.numpy as jnp
from jax.experimental import pallas as pl
from jax.experimental.pallas import tpu as pltpu


_LAYER_SIZES = [(784, 392), (392, 196), (196, 98), (98, 50), (50, 5)]
_NUM_CLASSES = 5
_PADDED_CLASSES = 128  # lane-dense output width


def _device_kind():
    try:
        return jax.devices()[0].device_kind.lower()
    except Exception:
        return ""


def _supports_bf16_elementwise():
    # v2-v5 VPU/EUP have no native bf16 path (bf16 elementwise gets decomposed and is
    # slower); v6e/v7x have bf16 VPU/EUP. Either path is numerically acceptable here.
    kind = _device_kind()
    return not any(tag in kind for tag in ("v2", "v3", "v4", "v5"))


def _min_grid_steps():
    # v7x has 2 TensorCores per chip: make sure the "parallel" batch axis has at least
    # 2 grid steps so both cores get work. Single-TC v5e/v6e keep 1-step minimum.
    kind = _device_kind()
    return 2 if ("v7" in kind or "7x" in kind) else 1


def _round_up(n, m):
    return ((n + m - 1) // m) * m


def _make_mlp_kernel(bf16_elementwise):
    def _mlp_kernel(x_ref,
                    w1_ref, b1_ref,
                    w2_ref, b2_ref,
                    w3_ref, b3_ref,
                    w45_ref, b45_ref,
                    o_ref):
        # Matmuls run on the MXU with bf16 inputs and f32 accumulation. The bias add
        # stays in f32; the sigmoid runs in bf16 on v6e/v7x (bf16 EUP) and f32 on v5e.
        def dense_sigmoid(h_bf16, w_ref, b_ref):
            acc = jnp.dot(h_bf16, w_ref[...],
                          preferred_element_type=jnp.float32) + b_ref[...]
            if bf16_elementwise:
                # One cast to bf16, sigmoid on bf16, output feeds the next MXU pass
                # directly (no extra cast).
                return jax.nn.sigmoid(acc.astype(jnp.bfloat16))
            # f32 sigmoid (v5e path), single cast to bf16 for the next MXU pass.
            return jax.nn.sigmoid(acc).astype(jnp.bfloat16)

        h = dense_sigmoid(x_ref[...], w1_ref, b1_ref)   # fc1 + sigmoid
        h = dense_sigmoid(h, w2_ref, b2_ref)            # fc2 + sigmoid
        h = dense_sigmoid(h, w3_ref, b3_ref)            # fc3 + sigmoid

        # Folded fc4+fc5 (fc4 has no activation): one MXU pass to 128 padded classes.
        # Padded weight columns are zero and padded bias lanes are -1e30, so their
        # exp() terms are exactly 0 and do not perturb the softmax.
        logits = jnp.dot(h, w45_ref[...],
                         preferred_element_type=jnp.float32) + b45_ref[...]
        m = jnp.max(logits, axis=1, keepdims=True)
        e = jnp.exp(logits - m)
        inv = 1.0 / jnp.sum(e, axis=1, keepdims=True)   # exact; only a (TM, 1) column
        o_ref[...] = (e * inv).astype(o_ref.dtype)

    return _mlp_kernel


def classifier_net_forward(x, params, *, tile_m=2048):
    """x: (B, 784) float. params: w{i}: (in, out), b{i}: (1, out). Returns (B, 5) f32."""
    B = x.shape[0]
    bf16_elementwise = _supports_bf16_elementwise()
    min_steps = _min_grid_steps()

    # Batch tile: multiple of 8 (sublane); capped at tile_m so throughput batches keep
    # the MXU busy without over-padding tiny ones; further capped so v7x gets >= 2
    # parallel grid steps across its two TensorCores.
    TM = min(tile_m, _round_up(B, 8))
    if min_steps > 1:
        TM = min(TM, _round_up(pl.cdiv(B, min_steps), 8))
    TM = max(TM, 8)
    B_pad = _round_up(B, TM)

    x = x.astype(jnp.bfloat16)  # halve the per-tile x DMA bytes
    if B_pad != B:
        x = jnp.pad(x, ((0, B_pad - B), (0, 0)))

    w = [params[f"w{i}"].astype(jnp.float32) for i in range(1, 6)]
    b = [params[f"b{i}"].astype(jnp.float32) for i in range(1, 6)]

    # Fold fc4 and fc5 in f32 (exact: no activation between them).
    w45 = w[3] @ w[4]               # (98, 5)
    b45 = b[3] @ w[4] + b[4]        # (1, 5)

    # Lane-dense output: pad the class axis to 128. Zero weight columns; -1e30 bias in
    # padded lanes so exp(padded logit - max) == 0 exactly in the kernel softmax.
    pad_c = _PADDED_CLASSES - _NUM_CLASSES
    w45 = jnp.pad(w45, ((0, 0), (0, pad_c)))
    b45 = jnp.concatenate(
        [b45, jnp.full((1, pad_c), -1e30, dtype=jnp.float32)], axis=1)

    weights = [arr.astype(jnp.bfloat16) for arr in (w[0], w[1], w[2], w45)]
    biases = [b[0], b[1], b[2], b45]  # biases stay f32

    def resident(arr):
        # Constant block index across the batch grid -> Pallas keeps the block resident
        # in VMEM (no per-iteration re-DMA of weights/biases).
        return pl.BlockSpec(arr.shape, lambda i: (0, 0))

    wb_args, wb_specs = [], []
    for wi, bi in zip(weights, biases):
        wb_args += [wi, bi]
        wb_specs += [resident(wi), resident(bi)]

    out = pl.pallas_call(
        _make_mlp_kernel(bf16_elementwise),
        out_shape=jax.ShapeDtypeStruct((B_pad, _PADDED_CLASSES), jnp.float32),
        grid_spec=pltpu.PrefetchScalarGridSpec(
            num_scalar_prefetch=0,
            grid=(B_pad // TM,),
            in_specs=[pl.BlockSpec((TM, 784), lambda i: (i, 0))] + wb_specs,
            out_specs=pl.BlockSpec((TM, _PADDED_CLASSES), lambda i: (i, 0)),
        ),
        compiler_params=pltpu.CompilerParams(
            # Batch axis is embarrassingly parallel: megacore-shards on v7x.
            dimension_semantics=("parallel",),
        ),
    )(x, *wb_args)
    return out[:B, :_NUM_CLASSES]


def classifier_net_reference(x, params):
    """Pure-JAX f32 reference matching the PyTorch forward."""
    h = x.astype(jnp.float32)
    h = jax.nn.sigmoid(h @ params["w1"] + params["b1"])
    h = jax.nn.sigmoid(h @ params["w2"] + params["b2"])
    h = jax.nn.sigmoid(h @ params["w3"] + params["b3"])
    h = h @ params["w4"] + params["b4"]
    logits = h @ params["w5"] + params["b5"]
    return jax.nn.softmax(logits, axis=1)


def init_params(key):
    params = {}
    keys = jax.random.split(key, 2 * len(_LAYER_SIZES))
    for i, (fan_in, fan_out) in enumerate(_LAYER_SIZES):
        # Mimics PyTorch's uniform(-1/sqrt(fan_in), 1/sqrt(fan_in)) init.
        bound = 1.0 / jnp.sqrt(jnp.float32(fan_in))
        params[f"w{i + 1}"] = jax.random.uniform(
            keys[2 * i], (fan_in, fan_out), jnp.float32, minval=-bound, maxval=bound)
        params[f"b{i + 1}"] = jax.random.uniform(
            keys[2 * i + 1], (1, fan_out), jnp.float32, minval=-bound, maxval=bound)
    return params


if __name__ == "__main__":
    key = jax.random.PRNGKey(0)
    pkey, xkey = jax.random.split(key)
    params = init_params(pkey)

    batch = 8
    x = jax.random.normal(xkey, (batch, 784), dtype=jnp.float32)

    out = classifier_net_forward(x, params)
    out = jax.block_until_ready(out)

    # sanity: shape, softmax rows sum to 1 (exact normalization), close to f32 reference
    assert out.shape == (batch, _NUM_CLASSES)
    row_sums = jnp.sum(out, axis=1)
    assert bool(jnp.all(jnp.abs(row_sums - 1.0) < 1e-4))

    ref = classifier_net_reference(x, params)
    assert bool(jnp.max(jnp.abs(out - ref)) < 5e-2)  # bf16 matmul/sigmoid drift

    print("KERNEL_OK")
</pallas_src>

<mosaic_0001>
module attributes {stable_mosaic.version = 11 : i64} {
  func.func @_mlp_kernel(%arg0: i32, %arg1: memref<8x784xbf16, #tpu.memory_space<vmem>>, %arg2: memref<784x392xbf16, #tpu.memory_space<vmem>>, %arg3: memref<1x392xf32, #tpu.memory_space<vmem>>, %arg4: memref<392x196xbf16, #tpu.memory_space<vmem>>, %arg5: memref<1x196xf32, #tpu.memory_space<vmem>>, %arg6: memref<196x98xbf16, #tpu.memory_space<vmem>>, %arg7: memref<1x98xf32, #tpu.memory_space<vmem>>, %arg8: memref<98x128xbf16, #tpu.memory_space<vmem>>, %arg9: memref<1x128xf32, #tpu.memory_space<vmem>>, %arg10: memref<8x128xf32, #tpu.memory_space<vmem>>) attributes {dimension_semantics = [#tpu.dimension_semantics<parallel>], iteration_bounds = array<i64: 1>, scalar_prefetch = 0 : i64, scratch_operands = 0 : i64, tpu.core_type = #tpu.core_type<tc>, window_params = [{transform_indices = @transform_0, window_bounds = array<i64: 8, 784>}, {pipeline_mode = #tpu.pipeline_mode<synchronous>, transform_indices = @transform_1, window_bounds = array<i64: 784, 392>}, {pipeline_mode = #tpu.pipeline_mode<synchronous>, transform_indices = @transform_2, window_bounds = array<i64: 1, 392>}, {pipeline_mode = #tpu.pipeline_mode<synchronous>, transform_indices = @transform_3, window_bounds = array<i64: 392, 196>}, {pipeline_mode = #tpu.pipeline_mode<synchronous>, transform_indices = @transform_4, window_bounds = array<i64: 1, 196>}, {pipeline_mode = #tpu.pipeline_mode<synchronous>, transform_indices = @transform_5, window_bounds = array<i64: 196, 98>}, {pipeline_mode = #tpu.pipeline_mode<synchronous>, transform_indices = @transform_6, window_bounds = array<i64: 1, 98>}, {pipeline_mode = #tpu.pipeline_mode<synchronous>, transform_indices = @transform_7, window_bounds = array<i64: 98, 128>}, {pipeline_mode = #tpu.pipeline_mode<synchronous>, transform_indices = @transform_8, window_bounds = array<i64: 1, 128>}, {transform_indices = @transform_9, window_bounds = array<i64: 8, 128>}]} {
    %c0 = arith.constant 0 : index
    %c0_0 = arith.constant 0 : index
    %0 = vector.load %arg1[%c0, %c0_0] : memref<8x784xbf16, #tpu.memory_space<vmem>>, vector<8x784xbf16>
    %c0_1 = arith.constant 0 : index
    %c0_2 = arith.constant 0 : index
    %1 = vector.load %arg2[%c0_1, %c0_2] : memref<784x392xbf16, #tpu.memory_space<vmem>>, vector<784x392xbf16>
    %cst = arith.constant dense<0.000000e+00> : vector<8x392xf32>
    %2 = tpu.matmul %0, %1, %cst {dimension_numbers = #tpu.dot_dimension_numbers<[1], [0], [0], [1], [0, 0, 1, 1], [], []>} : vector<8x784xbf16>, vector<784x392xbf16>, vector<8x392xf32> -> vector<8x392xf32>
    %c0_3 = arith.constant 0 : index
    %c0_4 = arith.constant 0 : index
    %3 = vector.load %arg3[%c0_3, %c0_4] : memref<1x392xf32, #tpu.memory_space<vmem>>, vector<1x392xf32>
    %4 = vector.broadcast %3 : vector<1x392xf32> to vector<8x392xf32>
    %5 = arith.addf %2, %4 : vector<8x392xf32>
    %6 = arith.truncf %5 : vector<8x392xf32> to vector<8x392xbf16>
    %7 = arith.negf %6 : vector<8x392xbf16>
    %8 = math.exp %7 : vector<8x392xbf16>
    %cst_5 = arith.constant 1.000000e+00 : bf16
    %9 = vector.broadcast %cst_5 : bf16 to vector<8x392xbf16>
    %10 = arith.addf %9, %8 : vector<8x392xbf16>
    %11 = arith.divf %9, %10 : vector<8x392xbf16>
    %c0_6 = arith.constant 0 : index
    %c0_7 = arith.constant 0 : index
    %12 = vector.load %arg4[%c0_6, %c0_7] : memref<392x196xbf16, #tpu.memory_space<vmem>>, vector<392x196xbf16>
    %cst_8 = arith.constant dense<0.000000e+00> : vector<8x196xf32>
    %13 = tpu.matmul %11, %12, %cst_8 {dimension_numbers = #tpu.dot_dimension_numbers<[1], [0], [0], [1], [0, 0, 1, 1], [], []>} : vector<8x392xbf16>, vector<392x196xbf16>, vector<8x196xf32> -> vector<8x196xf32>
    %c0_9 = arith.constant 0 : index
    %c0_10 = arith.constant 0 : index
    %14 = vector.load %arg5[%c0_9, %c0_10] : memref<1x196xf32, #tpu.memory_space<vmem>>, vector<1x196xf32>
    %15 = vector.broadcast %14 : vector<1x196xf32> to vector<8x196xf32>
    %16 = arith.addf %13, %15 : vector<8x196xf32>
    %17 = arith.truncf %16 : vector<8x196xf32> to vector<8x196xbf16>
    %18 = arith.negf %17 : vector<8x196xbf16>
    %19 = math.exp %18 : vector<8x196xbf16>
    %cst_11 = arith.constant 1.000000e+00 : bf16
    %20 = vector.broadcast %cst_11 : bf16 to vector<8x196xbf16>
    %21 = arith.addf %20, %19 : vector<8x196xbf16>
    %22 = arith.divf %20, %21 : vector<8x196xbf16>
    %c0_12 = arith.constant 0 : index
    %c0_13 = arith.constant 0 : index
    %23 = vector.load %arg6[%c0_12, %c0_13] : memref<196x98xbf16, #tpu.memory_space<vmem>>, vector<196x98xbf16>
    %cst_14 = arith.constant dense<0.000000e+00> : vector<8x98xf32>
    %24 = tpu.matmul %22, %23, %cst_14 {dimension_numbers = #tpu.dot_dimension_numbers<[1], [0], [0], [1], [0, 0, 1, 1], [], []>} : vector<8x196xbf16>, vector<196x98xbf16>, vector<8x98xf32> -> vector<8x98xf32>
    %c0_15 = arith.constant 0 : index
    %c0_16 = arith.constant 0 : index
    %25 = vector.load %arg7[%c0_15, %c0_16] : memref<1x98xf32, #tpu.memory_space<vmem>>, vector<1x98xf32>
    %26 = vector.broadcast %25 : vector<1x98xf32> to vector<8x98xf32>
    %27 = arith.addf %24, %26 : vector<8x98xf32>
    %28 = arith.truncf %27 : vector<8x98xf32> to vector<8x98xbf16>
    %29 = arith.negf %28 : vector<8x98xbf16>
    %30 = math.exp %29 : vector<8x98xbf16>
    %cst_17 = arith.constant 1.000000e+00 : bf16
    %31 = vector.broadcast %cst_17 : bf16 to vector<8x98xbf16>
    %32 = arith.addf %31, %30 : vector<8x98xbf16>
    %33 = arith.divf %31, %32 : vector<8x98xbf16>
    %c0_18 = arith.constant 0 : index
    %c0_19 = arith.constant 0 : index
    %34 = vector.load %arg8[%c0_18, %c0_19] : memref<98x128xbf16, #tpu.memory_space<vmem>>, vector<98x128xbf16>
    %cst_20 = arith.constant dense<0.000000e+00> : vector<8x128xf32>
    %35 = tpu.matmul %33, %34, %cst_20 {dimension_numbers = #tpu.dot_dimension_numbers<[1], [0], [0], [1], [0, 0, 1, 1], [], []>} : vector<8x98xbf16>, vector<98x128xbf16>, vector<8x128xf32> -> vector<8x128xf32>
    %c0_21 = arith.constant 0 : index
    %c0_22 = arith.constant 0 : index
    %36 = vector.load %arg9[%c0_21, %c0_22] : memref<1x128xf32, #tpu.memory_space<vmem>>, vector<1x128xf32>
    %37 = vector.broadcast %36 : vector<1x128xf32> to vector<8x128xf32>
    %38 = arith.addf %35, %37 : vector<8x128xf32>
    %cst_23 = arith.constant dense<0xFF800000> : vector<8xf32>
    %39 = vector.multi_reduction <maximumf>, %38, %cst_23 [1] : vector<8x128xf32> to vector<8xf32>
    %40 = vector.shape_cast %39 : vector<8xf32> to vector<8x1xf32>
    %41 = vector.broadcast %40 : vector<8x1xf32> to vector<8x128xf32>
    %42 = arith.subf %38, %41 : vector<8x128xf32>
    %43 = math.exp %42 : vector<8x128xf32>
    %cst_24 = arith.constant dense<0.000000e+00> : vector<8xf32>
    %44 = vector.multi_reduction <add>, %43, %cst_24 [1] : vector<8x128xf32> to vector<8xf32>
    %45 = vector.shape_cast %44 : vector<8xf32> to vector<8x1xf32>
    %cst_25 = arith.constant 1.000000e+00 : f32
    %46 = vector.broadcast %cst_25 : f32 to vector<8x1xf32>
    %47 = arith.divf %46, %45 : vector<8x1xf32>
    %48 = vector.broadcast %47 : vector<8x1xf32> to vector<8x128xf32>
    %49 = arith.mulf %43, %48 : vector<8x128xf32>
    %c0_26 = arith.constant 0 : index
    %c0_27 = arith.constant 0 : index
    %50 = vector.load %arg10[%c0_26, %c0_27] : memref<8x128xf32, #tpu.memory_space<vmem>>, vector<8x128xf32>
    tpu.vector_store %arg10[%c0_26, %c0_27], %49 {strides = array<i32>} : memref<8x128xf32, #tpu.memory_space<vmem>>, vector<8x128xf32>,
    return
  }
  func.func @transform_0(%arg0: i32) -> (i32, i32) {
    %c0_i32 = arith.constant 0 : i32
    %c0_i32_0 = arith.constant 0 : i32
    return %arg0, %c0_i32 : i32, i32
  }
  func.func @transform_1(%arg0: i32) -> (i32, i32) {
    %c0_i32 = arith.constant 0 : i32
    %c0_i32_0 = arith.constant 0 : i32
    %c0_i32_1 = arith.constant 0 : i32
    return %c0_i32, %c0_i32_0 : i32, i32
  }
  func.func @transform_2(%arg0: i32) -> (i32, i32) {
    %c0_i32 = arith.constant 0 : i32
    %c0_i32_0 = arith.constant 0 : i32
    %c0_i32_1 = arith.constant 0 : i32
    return %c0_i32, %c0_i32_0 : i32, i32
  }
  func.func @transform_3(%arg0: i32) -> (i32, i32) {
    %c0_i32 = arith.constant 0 : i32
    %c0_i32_0 = arith.constant 0 : i32
    %c0_i32_1 = arith.constant 0 : i32
    return %c0_i32, %c0_i32_0 : i32, i32
  }
  func.func @transform_4(%arg0: i32) -> (i32, i32) {
    %c0_i32 = arith.constant 0 : i32
    %c0_i32_0 = arith.constant 0 : i32
    %c0_i32_1 = arith.constant 0 : i32
    return %c0_i32, %c0_i32_0 : i32, i32
  }
  func.func @transform_5(%arg0: i32) -> (i32, i32) {
    %c0_i32 = arith.constant 0 : i32
    %c0_i32_0 = arith.constant 0 : i32
    %c0_i32_1 = arith.constant 0 : i32
    return %c0_i32, %c0_i32_0 : i32, i32
  }
  func.func @transform_6(%arg0: i32) -> (i32, i32) {
    %c0_i32 = arith.constant 0 : i32
    %c0_i32_0 = arith.constant 0 : i32
    %c0_i32_1 = arith.constant 0 : i32
    return %c0_i32, %c0_i32_0 : i32, i32
  }
  func.func @transform_7(%arg0: i32) -> (i32, i32) {
    %c0_i32 = arith.constant 0 : i32
    %c0_i32_0 = arith.constant 0 : i32
    %c0_i32_1 = arith.constant 0 : i32
    return %c0_i32, %c0_i32_0 : i32, i32
  }
  func.func @transform_8(%arg0: i32) -> (i32, i32) {
    %c0_i32 = arith.constant 0 : i32
    %c0_i32_0 = arith.constant 0 : i32
    %c0_i32_1 = arith.constant 0 : i32
    return %c0_i32, %c0_i32_0 : i32, i32
  }
  func.func @transform_9(%arg0: i32) -> (i32, i32) {
    %c0_i32 = arith.constant 0 : i32
    %c0_i32_0 = arith.constant 0 : i32
    return %arg0, %c0_i32 : i32, i32
  }
}

</mosaic_0001>

<llo_original>
// kernel: tpu_custom_call.1
$region0: #{tpu_custom_call.1}
  #allocation0 [shape = 'u32[]', space=smem, size = 0x4, offset = 0x4, fixed_abs, tag = 'smem constant byte address 0x4 - core index']
  #allocation1 [shape = 'u32[144,128]{1,0:T(1,128)}', space=vmem, size = 0x12000, scoped, tag = 'internal scratch']
  %s0 = inlined_call_operand.vmem [shape: bf16[8,784], index: 0, kind: input, shape index: {}]
  %s1 = inlined_call_operand.vmem [shape: bf16[784,392], index: 1, kind: input, shape index: {}]
  %s2 = inlined_call_operand.vmem [shape: f32[1,392], index: 2, kind: input, shape index: {}]
  %s3 = inlined_call_operand.vmem [shape: bf16[392,196], index: 3, kind: input, shape index: {}]
  %s4 = inlined_call_operand.vmem [shape: f32[1,196], index: 4, kind: input, shape index: {}]
  %s5 = inlined_call_operand.vmem [shape: bf16[196,98], index: 5, kind: input, shape index: {}]
  %s6 = inlined_call_operand.vmem [shape: f32[1,98], index: 6, kind: input, shape index: {}]
  %s7 = inlined_call_operand.vmem [shape: bf16[98,128], index: 7, kind: input, shape index: {}]
  %s8 = inlined_call_operand.vmem [shape: f32[1,128], index: 8, kind: input, shape index: {}]
  %s9 = inlined_call_operand.hbm [shape: f32[8,128], index: 9, kind: output, shape index: {}]
  %s10 = sld [smem:[#allocation0]]
  $region46: #{tpu_custom_call.1} parent=0
    _
  %s12 = ssub.s32 1, %s10
  %s13 = scalar_select 0, %s12, %s10
  $region1: #{tpu_custom_call.1} parent=0
    #allocation2 [shape = 'u8[4096]{0}', space=vmem, size = 0x1000, scoped, tag = 'output window, operand 0, single buffered']
    #allocation3 [shape = 's32[1]{0}', space=sflag, size = 0x4, scoped, tag = 'scoped memory for tpu_custom_call.1']
    %14 = vsyncpa [#allocation3], 0
    // Predicated region
    $region2: #{tpu_custom_call.1} parent=1 // pred_check
      _
    $region3: #{tpu_custom_call.1} parent=1 // pred_check_branch
      %16 = sbr.rel (0) target = $region5
    $region4: #{tpu_custom_call.1} parent=1 // pred_region
      _
    $region5: #{tpu_custom_call.1} parent=1 // pred_fallthru
      _
    // Predicated region
    $region6: #{tpu_custom_call.1} parent=1 // pred_check
      _
    $region7: #{tpu_custom_call.1} parent=1 // pred_check_branch
      %18 = sbr.rel (0) target = $region9
    $region8: #{tpu_custom_call.1} parent=1 // pred_region
      _
    $region9: #{tpu_custom_call.1} parent=1 // pred_fallthru
      _
    // Predicated region
    $region10: #{tpu_custom_call.1} parent=1 // pred_check
      _
    $region11: #{tpu_custom_call.1} parent=1 // pred_check_branch
      %20 = sbr.rel (0) target = $region13
    $region12: #{tpu_custom_call.1} parent=1 // pred_region
      _
    $region13: #{tpu_custom_call.1} parent=1 // pred_fallthru
      _
    // Predicated region
    $region14: #{tpu_custom_call.1} parent=1 // pred_check
      _
    $region15: #{tpu_custom_call.1} parent=1 // pred_check_branch
      %22 = sbr.rel (0) target = $region17
    $region16: #{tpu_custom_call.1} parent=1 // pred_region
      _
    $region17: #{tpu_custom_call.1} parent=1 // pred_fallthru
      _
    // Predicated region
    $region18: #{tpu_custom_call.1} parent=1 // pred_check
      _
    $region19: #{tpu_custom_call.1} parent=1 // pred_check_branch
      %24 = sbr.rel (0) target = $region21
    $region20: #{tpu_custom_call.1} parent=1 // pred_region
      _
    $region21: #{tpu_custom_call.1} parent=1 // pred_fallthru
      _
    // Predicated region
    $region22: #{tpu_custom_call.1} parent=1 // pred_check
      _
    $region23: #{tpu_custom_call.1} parent=1 // pred_check_branch
      %26 = sbr.rel (0) target = $region25
    $region24: #{tpu_custom_call.1} parent=1 // pred_region
      _
    $region25: #{tpu_custom_call.1} parent=1 // pred_fallthru
      _
    // Predicated region
    $region26: #{tpu_custom_call.1} parent=1 // pred_check
      _
    $region27: #{tpu_custom_call.1} parent=1 // pred_check_branch
      %28 = sbr.rel (0) target = $region29
    $region28: #{tpu_custom_call.1} parent=1 // pred_region
      _
    $region29: #{tpu_custom_call.1} parent=1 // pred_fallthru
      _
    // Predicated region
    $region30: #{tpu_custom_call.1} parent=1 // pred_check
      _
    $region31: #{tpu_custom_call.1} parent=1 // pred_check_branch
      %30 = sbr.rel (0) target = $region33
    $region32: #{tpu_custom_call.1} parent=1 // pred_region
      _
    $region33: #{tpu_custom_call.1} parent=1 // pred_fallthru
      _
    // Predicated region
    $region34: #{tpu_custom_call.1} parent=1 // pred_check
      _
    $region35: #{tpu_custom_call.1} parent=1 // pred_check_branch
      %32 = sbr.rel (0) target = $region37
    $region36: #{tpu_custom_call.1} parent=1 // pred_region
      _
    $region37: #{tpu_custom_call.1} parent=1 // pred_fallthru
      _
    %v35 = vld [vmem:[%s0] sm:$0xff]
    %v36 = vld [vmem:[%s0 + $0x8] sm:$0xff]
    %v37 = vld [vmem:[%s0 + $0x10] sm:$0xff]
    %v38 = vld [vmem:[%s0 + $0x18] sm:$0xf]
    %v39 = vld [vmem:[%s1] sm:$0xff]
    %v40 = vld [vmem:[%s1 + $0x8] sm:$0xff]
    %v41 = vld [vmem:[%s1 + $0x10] sm:$0xff]
    %v42 = vld [vmem:[%s1 + $0x18] sm:$0xff]
    %v43 = vld [vmem:[%s1 + $0x20] sm:$0xff]
    %v44 = vld [vmem:[%s1 + $0x28] sm:$0xff]
    %v45 = vld [vmem:[%s1 + $0x30] sm:$0xff]
    %v46 = vld [vmem:[%s1 + $0x38] sm:$0xff]
    %v47 = vld [vmem:[%s1 + $0x40] sm:$0xff]
    %v48 = vld [vmem:[%s1 + $0x48] sm:$0xff]
    %v49 = vld [vmem:[%s1 + $0x50] sm:$0xff]
    %v50 = vld [vmem:[%s1 + $0x58] sm:$0xff]
    %v51 = vld [vmem:[%s1 + $0x60] sm:$0xff]
    %v52 = vld [vmem:[%s1 + $0x68] sm:$0xff]
    %v53 = vld [vmem:[%s1 + $0x70] sm:$0xff]
    %v54 = vld [vmem:[%s1 + $0x78] sm:$0xff]
    %v55 = vld [vmem:[%s1 + $0x80] sm:$0xff]
    %v56 = vld [vmem:[%s1 + $0x88] sm:$0xff]
    %v57 = vld [vmem:[%s1 + $0x90] sm:$0xff]
    %v58 = vld [vmem:[%s1 + $0x98] sm:$0xff]
    %v59 = vld [vmem:[%s1 + $0xa0] sm:$0xff]
    %v60 = vld [vmem:[%s1 + $0xa8] sm:$0xff]
    %v61 = vld [vmem:[%s1 + $0xb0] sm:$0xff]
    %v62 = vld [vmem:[%s1 + $0xb8] sm:$0xff]
    %v63 = vld [vmem:[%s1 + $0xc0] sm:$0xff]
    %v64 = vld [vmem:[%s1 + $0xc8] sm:$0xff]
    %v65 = vld [vmem:[%s1 + $0xd0] sm:$0xff]
    %v66 = vld [vmem:[%s1 + $0xd8] sm:$0xff]
    %v67 = vld [vmem:[%s1 + $0xe0] sm:$0xff]
    %v68 = vld [vmem:[%s1 + $0xe8] sm:$0xff]
    %v69 = vld [vmem:[%s1 + $0xf0] sm:$0xff]
    %v70 = vld [vmem:[%s1 + $0xf8] sm:$0xff]
    %v71 = vld [vmem:[%s1 + $0x100] sm:$0xff]
    %v72 = vld [vmem:[%s1 + $0x108] sm:$0xff]
    %v73 = vld [vmem:[%s1 + $0x110] sm:$0xff]
    %v74 = vld [vmem:[%s1 + $0x118] sm:$0xff]
    %v75 = vld [vmem:[%s1 + $0x120] sm:$0xff]
    %v76 = vld [vmem:[%s1 + $0x128] sm:$0xff]
    %v77 = vld [vmem:[%s1 + $0x130] sm:$0xff]
    %v78 = vld [vmem:[%s1 + $0x138] sm:$0xff]
    %v79 = vld [vmem:[%s1 + $0x140] sm:$0xff]
    %v80 = vld [vmem:[%s1 + $0x148] sm:$0xff]
    %v81 = vld [vmem:[%s1 + $0x150] sm:$0xff]
    %v82 = vld [vmem:[%s1 + $0x158] sm:$0xff]
    %v83 = vld [vmem:[%s1 + $0x160] sm:$0xff]
    %v84 = vld [vmem:[%s1 + $0x168] sm:$0xff]
    %v85 = vld [vmem:[%s1 + $0x170] sm:$0xff]
    %v86 = vld [vmem:[%s1 + $0x178] sm:$0xff]
    %v87 = vld [vmem:[%s1 + $0x180] sm:$0xff]
    %v88 = vld [vmem:[%s1 + $0x188] sm:$0xff]
    %v89 = vld [vmem:[%s1 + $0x190] sm:$0xff]
    %v90 = vld [vmem:[%s1 + $0x198] sm:$0xff]
    %v91 = vld [vmem:[%s1 + $0x1a0] sm:$0xff]
    %v92 = vld [vmem:[%s1 + $0x1a8] sm:$0xff]
    %v93 = vld [vmem:[%s1 + $0x1b0] sm:$0xff]
    %v94 = vld [vmem:[%s1 + $0x1b8] sm:$0xff]
    %v95 = vld [vmem:[%s1 + $0x1c0] sm:$0xff]
    %v96 = vld [vmem:[%s1 + $0x1c8] sm:$0xff]
    %v97 = vld [vmem:[%s1 + $0x1d0] sm:$0xff]
    %v98 = vld [vmem:[%s1 + $0x1d8] sm:$0xff]
    %v99 = vld [vmem:[%s1 + $0x1e0] sm:$0xff]
    %v100 = vld [vmem:[%s1 + $0x1e8] sm:$0xff]
    %v101 = vld [vmem:[%s1 + $0x1f0] sm:$0xff]
    %v102 = vld [vmem:[%s1 + $0x1f8] sm:$0xff]
    %v103 = vld [vmem:[%s1 + $0x200] sm:$0xff]
    %v104 = vld [vmem:[%s1 + $0x208] sm:$0xff]
    %v105 = vld [vmem:[%s1 + $0x210] sm:$0xff]
    %v106 = vld [vmem:[%s1 + $0x218] sm:$0xff]
    %v107 = vld [vmem:[%s1 + $0x220] sm:$0xff]
    %v108 = vld [vmem:[%s1 + $0x228] sm:$0xff]
    %v109 = vld [vmem:[%s1 + $0x230] sm:$0xff]
    %v110 = vld [vmem:[%s1 + $0x238] sm:$0xff]
    %v111 = vld [vmem:[%s1 + $0x240] sm:$0xff]
    %v112 = vld [vmem:[%s1 + $0x248] sm:$0xff]
    %v113 = vld [vmem:[%s1 + $0x250] sm:$0xff]
    %v114 = vld [vmem:[%s1 + $0x258] sm:$0xff]
    %v115 = vld [vmem:[%s1 + $0x260] sm:$0xff]
    %v116 = vld [vmem:[%s1 + $0x268] sm:$0xff]
    %v117 = vld [vmem:[%s1 + $0x270] sm:$0xff]
    %v118 = vld [vmem:[%s1 + $0x278] sm:$0xff]
    %v119 = vld [vmem:[%s1 + $0x280] sm:$0xff]
    %v120 = vld [vmem:[%s1 + $0x288] sm:$0xff]
    %v121 = vld [vmem:[%s1 + $0x290] sm:$0xff]
    %v122 = vld [vmem:[%s1 + $0x298] sm:$0xff]
    %v123 = vld [vmem:[%s1 + $0x2a0] sm:$0xff]
    %v124 = vld [vmem:[%s1 + $0x2a8] sm:$0xff]
    %v125 = vld [vmem:[%s1 + $0x2b0] sm:$0xff]
    %v126 = vld [vmem:[%s1 + $0x2b8] sm:$0xff]
    %v127 = vld [vmem:[%s1 + $0x2c0] sm:$0xff]
    %v128 = vld [vmem:[%s1 + $0x2c8] sm:$0xff]
    %v129 = vld [vmem:[%s1 + $0x2d0] sm:$0xff]
    %v130 = vld [vmem:[%s1 + $0x2d8] sm:$0xff]
    %v131 = vld [vmem:[%s1 + $0x2e0] sm:$0xff]
    %v132 = vld [vmem:[%s1 + $0x2e8] sm:$0xff]
    %v133 = vld [vmem:[%s1 + $0x2f0] sm:$0xff]
    %v134 = vld [vmem:[%s1 + $0x2f8] sm:$0xff]
    %v135 = vld [vmem:[%s1 + $0x300] sm:$0xff]
    %v136 = vld [vmem:[%s1 + $0x308] sm:$0xff]
    %v137 = vld [vmem:[%s1 + $0x310] sm:$0xff]
    %v138 = vld [vmem:[%s1 + $0x318] sm:$0xff]
    %v139 = vld [vmem:[%s1 + $0x320] sm:$0xff]
    %v140 = vld [vmem:[%s1 + $0x328] sm:$0xff]
    %v141 = vld [vmem:[%s1 + $0x330] sm:$0xff]
    %v142 = vld [vmem:[%s1 + $0x338] sm:$0xff]
    %v143 = vld [vmem:[%s1 + $0x340] sm:$0xff]
    %v144 = vld [vmem:[%s1 + $0x348] sm:$0xff]
    %v145 = vld [vmem:[%s1 + $0x350] sm:$0xff]
    %v146 = vld [vmem:[%s1 + $0x358] sm:$0xff]
    %v147 = vld [vmem:[%s1 + $0x360] sm:$0xff]
    %v148 = vld [vmem:[%s1 + $0x368] sm:$0xff]
    %v149 = vld [vmem:[%s1 + $0x370] sm:$0xff]
    %v150 = vld [vmem:[%s1 + $0x378] sm:$0xff]
    %v151 = vld [vmem:[%s1 + $0x380] sm:$0xff]
    %v152 = vld [vmem:[%s1 + $0x388] sm:$0xff]
    %v153 = vld [vmem:[%s1 + $0x390] sm:$0xff]
    %v154 = vld [vmem:[%s1 + $0x398] sm:$0xff]
    %v155 = vld [vmem:[%s1 + $0x3a0] sm:$0xff]
    %v156 = vld [vmem:[%s1 + $0x3a8] sm:$0xff]
    %v157 = vld [vmem:[%s1 + $0x3b0] sm:$0xff]
    %v158 = vld [vmem:[%s1 + $0x3b8] sm:$0xff]
    %v159 = vld [vmem:[%s1 + $0x3c0] sm:$0xff]
    %v160 = vld [vmem:[%s1 + $0x3c8] sm:$0xff]
    %v161 = vld [vmem:[%s1 + $0x3d0] sm:$0xff]
    %v162 = vld [vmem:[%s1 + $0x3d8] sm:$0xff]
    %v163 = vld [vmem:[%s1 + $0x3e0] sm:$0xff]
    %v164 = vld [vmem:[%s1 + $0x3e8] sm:$0xff]
    %v165 = vld [vmem:[%s1 + $0x3f0] sm:$0xff]
    %v166 = vld [vmem:[%s1 + $0x3f8] sm:$0xff]
    %v167 = vld [vmem:[%s1 + $0x400] sm:$0xff]
    %v168 = vld [vmem:[%s1 + $0x408] sm:$0xff]
    %v169 = vld [vmem:[%s1 + $0x410] sm:$0xff]
    %v170 = vld [vmem:[%s1 + $0x418] sm:$0xff]
    %v171 = vld [vmem:[%s1 + $0x420] sm:$0xff]
    %v172 = vld [vmem:[%s1 + $0x428] sm:$0xff]
    %v173 = vld [vmem:[%s1 + $0x430] sm:$0xff]
    %v174 = vld [vmem:[%s1 + $0x438] sm:$0xff]
    %v175 = vld [vmem:[%s1 + $0x440] sm:$0xff]
    %v176 = vld [vmem:[%s1 + $0x448] sm:$0xff]
    %v177 = vld [vmem:[%s1 + $0x450] sm:$0xff]
    %v178 = vld [vmem:[%s1 + $0x458] sm:$0xff]
    %v179 = vld [vmem:[%s1 + $0x460] sm:$0xff]
    %v180 = vld [vmem:[%s1 + $0x468] sm:$0xff]
    %v181 = vld [vmem:[%s1 + $0x470] sm:$0xff]
    %v182 = vld [vmem:[%s1 + $0x478] sm:$0xff]
    %v183 = vld [vmem:[%s1 + $0x480] sm:$0xff]
    %v184 = vld [vmem:[%s1 + $0x488] sm:$0xff]
    %v185 = vld [vmem:[%s1 + $0x490] sm:$0xff]
    %v186 = vld [vmem:[%s1 + $0x498] sm:$0xff]
    %v187 = vld [vmem:[%s1 + $0x4a0] sm:$0xff]
    %v188 = vld [vmem:[%s1 + $0x4a8] sm:$0xff]
    %v189 = vld [vmem:[%s1 + $0x4b0] sm:$0xff]
    %v190 = vld [vmem:[%s1 + $0x4b8] sm:$0xff]
    %v191 = vld [vmem:[%s1 + $0x4c0] sm:$0xff]
    %v192 = vld [vmem:[%s1 + $0x4c8] sm:$0xff]
    %v193 = vld [vmem:[%s1 + $0x4d0] sm:$0xff]
    %v194 = vld [vmem:[%s1 + $0x4d8] sm:$0xff]
    %v195 = vld [vmem:[%s1 + $0x4e0] sm:$0xff]
    %v196 = vld [vmem:[%s1 + $0x4e8] sm:$0xff]
    %v197 = vld [vmem:[%s1 + $0x4f0] sm:$0xff]
    %v198 = vld [vmem:[%s1 + $0x4f8] sm:$0xff]
    %v199 = vld [vmem:[%s1 + $0x500] sm:$0xff]
    %v200 = vld [vmem:[%s1 + $0x508] sm:$0xff]
    %v201 = vld [vmem:[%s1 + $0x510] sm:$0xff]
    %v202 = vld [vmem:[%s1 + $0x518] sm:$0xff]
    %v203 = vld [vmem:[%s1 + $0x520] sm:$0xff]
    %v204 = vld [vmem:[%s1 + $0x528] sm:$0xff]
    %v205 = vld [vmem:[%s1 + $0x530] sm:$0xff]
    %v206 = vld [vmem:[%s1 + $0x538] sm:$0xff]
    %v207 = vld [vmem:[%s1 + $0x540] sm:$0xff]
    %v208 = vld [vmem:[%s1 + $0x548] sm:$0xff]
    %v209 = vld [vmem:[%s1 + $0x550] sm:$0xff]
    %v210 = vld [vmem:[%s1 + $0x558] sm:$0xff]
    %v211 = vld [vmem:[%s1 + $0x560] sm:$0xff]
    %v212 = vld [vmem:[%s1 + $0x568] sm:$0xff]
    %v213 = vld [vmem:[%s1 + $0x570] sm:$0xff]
    %v214 = vld [vmem:[%s1 + $0x578] sm:$0xff]
    %v215 = vld [vmem:[%s1 + $0x580] sm:$0xff]
    %v216 = vld [vmem:[%s1 + $0x588] sm:$0xff]
    %v217 = vld [vmem:[%s1 + $0x590] sm:$0xff]
    %v218 = vld [vmem:[%s1 + $0x598] sm:$0xff]
    %v219 = vld [vmem:[%s1 + $0x5a0] sm:$0xff]
    %v220 = vld [vmem:[%s1 + $0x5a8] sm:$0xff]
    %v221 = vld [vmem:[%s1 + $0x5b0] sm:$0xff]
    %v222 = vld [vmem:[%s1 + $0x5b8] sm:$0xff]
    %v223 = vld [vmem:[%s1 + $0x5c0] sm:$0xff]
    %v224 = vld [vmem:[%s1 + $0x5c8] sm:$0xff]
    %v225 = vld [vmem:[%s1 + $0x5d0] sm:$0xff]
    %v226 = vld [vmem:[%s1 + $0x5d8] sm:$0xff]
    %v227 = vld [vmem:[%s1 + $0x5e0] sm:$0xff]
    %v228 = vld [vmem:[%s1 + $0x5e8] sm:$0xff]
    %v229 = vld [vmem:[%s1 + $0x5f0] sm:$0xff]
    %v230 = vld [vmem:[%s1 + $0x5f8] sm:$0xff]
    %v231 = vld [vmem:[%s1 + $0x600] sm:$0xff]
    %v232 = vld [vmem:[%s1 + $0x608] sm:$0xff]
    %v233 = vld [vmem:[%s1 + $0x610] sm:$0xff]
    %v234 = vld [vmem:[%s1 + $0x618] sm:$0xff]
    %v235 = vld [vmem:[%s2] sm:$0xf]
    %v237 = vlaneseq
    %v238 = vshrl.u32 %v237, 7
    %v239 = vsub.s32 0, %v238
    %v240 = vrot.slane %v235, %v239
    %v241 = vlaneseq
    %v242 = vshrl.u32 %v241, 7
    %v243 = vsub.s32 1, %v242
    %v244 = vrot.slane %v235, %v243
    %v245 = vlaneseq
    %v246 = vshrl.u32 %v245, 7
    %v247 = vsub.s32 2, %v246
    %v248 = vrot.slane %v235, %v247
    %v249 = vlaneseq
    %v250 = vshrl.u32 %v249, 7
    %v251 = vsub.s32 3, %v250
    %v252 = vrot.slane %v235, %v251
    %v261 = vunpack.c.l.b16 %v35
    %v262 = vunpack.c.h.b16 %v35
    %v263 = vunpack.c.l.b16 %v36
    %v264 = vunpack.c.h.b16 %v36
    %v265 = vunpack.c.l.b16 %v37
    %v266 = vunpack.c.h.b16 %v37
    %v267 = vunpack.c.l.b16 %v38
    %v268 = vpack.c.b16 %v261, %v261
    %v269 = vpack.c.b16 %v262, %v262
    %v270 = vpack.c.b16 %v263, %v263
    %v271 = vpack.c.b16 %v264, %v264
    %v272 = vpack.c.b16 %v265, %v265
    %v273 = vpack.c.b16 %v266, %v266
    %v274 = vpack.c.b16 %v267, %v267
    %v477 = vunpack.c.l.b16 %v39
    %v478 = vunpack.c.h.b16 %v39
    %v479 = vunpack.c.l.b16 %v40
    %v480 = vunpack.c.h.b16 %v40
    %v481 = vunpack.c.l.b16 %v41
    %v482 = vunpack.c.h.b16 %v41
    %v483 = vunpack.c.l.b16 %v42
    %v484 = vunpack.c.h.b16 %v42
    %v485 = vunpack.c.l.b16 %v43
    %v486 = vunpack.c.h.b16 %v43
    %v487 = vunpack.c.l.b16 %v44
    %v488 = vunpack.c.h.b16 %v44
    %v489 = vunpack.c.l.b16 %v45
    %v490 = vunpack.c.h.b16 %v45
    %v491 = vunpack.c.l.b16 %v46
    %v492 = vunpack.c.h.b16 %v46
    %v493 = vunpack.c.l.b16 %v47
    %v494 = vunpack.c.h.b16 %v47
    %v495 = vunpack.c.l.b16 %v48
    %v496 = vunpack.c.h.b16 %v48
    %v497 = vunpack.c.l.b16 %v49
    %v498 = vunpack.c.h.b16 %v49
    %v499 = vunpack.c.l.b16 %v50
    %v500 = vunpack.c.h.b16 %v50
    %v501 = vunpack.c.l.b16 %v51
    %v502 = vunpack.c.h.b16 %v51
    %v503 = vunpack.c.l.b16 %v52
    %v504 = vunpack.c.h.b16 %v52
    %v505 = vunpack.c.l.b16 %v53
    %v506 = vunpack.c.h.b16 %v53
    %v507 = vunpack.c.l.b16 %v54
    %v508 = vunpack.c.h.b16 %v54
    %v509 = vunpack.c.l.b16 %v55
    %v510 = vunpack.c.h.b16 %v55
    %v511 = vunpack.c.l.b16 %v56
    %v512 = vunpack.c.h.b16 %v56
    %v513 = vunpack.c.l.b16 %v57
    %v514 = vunpack.c.h.b16 %v57
    %v515 = vunpack.c.l.b16 %v58
    %v516 = vunpack.c.h.b16 %v58
    %v517 = vunpack.c.l.b16 %v59
    %v518 = vunpack.c.h.b16 %v59
    %v519 = vunpack.c.l.b16 %v60
    %v520 = vunpack.c.h.b16 %v60
    %v521 = vunpack.c.l.b16 %v61
    %v522 = vunpack.c.h.b16 %v61
    %v523 = vunpack.c.l.b16 %v62
    %v524 = vunpack.c.h.b16 %v62
    %v525 = vunpack.c.l.b16 %v63
    %v526 = vunpack.c.h.b16 %v63
    %v527 = vunpack.c.l.b16 %v64
    %v528 = vunpack.c.h.b16 %v64
    %v529 = vunpack.c.l.b16 %v65
    %v530 = vunpack.c.h.b16 %v65
    %v531 = vunpack.c.l.b16 %v66
    %v532 = vunpack.c.h.b16 %v66
    %v533 = vunpack.c.l.b16 %v67
    %v534 = vunpack.c.h.b16 %v67
    %v535 = vunpack.c.l.b16 %v68
    %v536 = vunpack.c.h.b16 %v68
    %v537 = vunpack.c.l.b16 %v69
    %v538 = vunpack.c.h.b16 %v69
    %v539 = vunpack.c.l.b16 %v70
    %v540 = vunpack.c.h.b16 %v70
    %v541 = vunpack.c.l.b16 %v71
    %v542 = vunpack.c.h.b16 %v71
    %v543 = vunpack.c.l.b16 %v72
    %v544 = vunpack.c.h.b16 %v72
    %v545 = vunpack.c.l.b16 %v73
    %v546 = vunpack.c.h.b16 %v73
    %v547 = vunpack.c.l.b16 %v74
    %v548 = vunpack.c.h.b16 %v74
    %v549 = vunpack.c.l.b16 %v75
    %v550 = vunpack.c.h.b16 %v75
    %v551 = vunpack.c.l.b16 %v76
    %v552 = vunpack.c.h.b16 %v76
    %v553 = vunpack.c.l.b16 %v77
    %v554 = vunpack.c.h.b16 %v77
    %v555 = vunpack.c.l.b16 %v78
    %v556 = vunpack.c.h.b16 %v78
    %v557 = vunpack.c.l.b16 %v79
    %v558 = vunpack.c.h.b16 %v79
    %v559 = vunpack.c.l.b16 %v80
    %v560 = vunpack.c.h.b16 %v80
    %v561 = vunpack.c.l.b16 %v81
    %v562 = vunpack.c.h.b16 %v81
    %v563 = vunpack.c.l.b16 %v82
    %v564 = vunpack.c.h.b16 %v82
    %v565 = vunpack.c.l.b16 %v83
    %v566 = vunpack.c.h.b16 %v83
    %v567 = vunpack.c.l.b16 %v84
    %v568 = vunpack.c.h.b16 %v84
    %v569 = vunpack.c.l.b16 %v85
    %v570 = vunpack.c.h.b16 %v85
    %v571 = vunpack.c.l.b16 %v86
    %v572 = vunpack.c.h.b16 %v86
    %v573 = vunpack.c.l.b16 %v87
    %v574 = vunpack.c.h.b16 %v87
    %v575 = vunpack.c.l.b16 %v88
    %v576 = vunpack.c.h.b16 %v88
    %v577 = vunpack.c.l.b16 %v89
    %v578 = vunpack.c.h.b16 %v89
    %v579 = vunpack.c.l.b16 %v90
    %v580 = vunpack.c.h.b16 %v90
    %v581 = vunpack.c.l.b16 %v91
    %v582 = vunpack.c.h.b16 %v91
    %v583 = vunpack.c.l.b16 %v92
    %v584 = vunpack.c.h.b16 %v92
    %v585 = vunpack.c.l.b16 %v93
    %v586 = vunpack.c.h.b16 %v93
    %v587 = vunpack.c.l.b16 %v94
    %v588 = vunpack.c.h.b16 %v94
    %v589 = vunpack.c.l.b16 %v95
    %v590 = vunpack.c.h.b16 %v95
    %v591 = vunpack.c.l.b16 %v96
    %v592 = vunpack.c.h.b16 %v96
    %v593 = vunpack.c.l.b16 %v97
    %v594 = vunpack.c.h.b16 %v97
    %v595 = vunpack.c.l.b16 %v98
    %v596 = vunpack.c.h.b16 %v98
    %v597 = vunpack.c.l.b16 %v99
    %v598 = vunpack.c.h.b16 %v99
    %v599 = vunpack.c.l.b16 %v100
    %v600 = vunpack.c.h.b16 %v100
    %v601 = vunpack.c.l.b16 %v101
    %v602 = vunpack.c.h.b16 %v101
    %v603 = vunpack.c.l.b16 %v102
    %v604 = vunpack.c.h.b16 %v102
    %v605 = vunpack.c.l.b16 %v103
    %v606 = vunpack.c.h.b16 %v103
    %v607 = vunpack.c.l.b16 %v104
    %v608 = vunpack.c.h.b16 %v104
    %v609 = vunpack.c.l.b16 %v105
    %v610 = vunpack.c.h.b16 %v105
    %v611 = vunpack.c.l.b16 %v106
    %v612 = vunpack.c.h.b16 %v106
    %v613 = vunpack.c.l.b16 %v107
    %v614 = vunpack.c.h.b16 %v107
    %v615 = vunpack.c.l.b16 %v108
    %v616 = vunpack.c.h.b16 %v108
    %v617 = vunpack.c.l.b16 %v109
    %v618 = vunpack.c.h.b16 %v109
    %v619 = vunpack.c.l.b16 %v110
    %v620 = vunpack.c.h.b16 %v110
    %v621 = vunpack.c.l.b16 %v111
    %v622 = vunpack.c.h.b16 %v111
    %v623 = vunpack.c.l.b16 %v112
    %v624 = vunpack.c.h.b16 %v112
    %v625 = vunpack.c.l.b16 %v113
    %v626 = vunpack.c.h.b16 %v113
    %v627 = vunpack.c.l.b16 %v114
    %v628 = vunpack.c.h.b16 %v114
    %v629 = vunpack.c.l.b16 %v115
    %v630 = vunpack.c.h.b16 %v115
    %v631 = vunpack.c.l.b16 %v116
    %v632 = vunpack.c.h.b16 %v116
    %v633 = vunpack.c.l.b16 %v117
    %v634 = vunpack.c.h.b16 %v117
    %v635 = vunpack.c.l.b16 %v118
    %v636 = vunpack.c.h.b16 %v118
    %v637 = vunpack.c.l.b16 %v119
    %v638 = vunpack.c.h.b16 %v119
    %v639 = vunpack.c.l.b16 %v120
    %v640 = vunpack.c.h.b16 %v120
    %v641 = vunpack.c.l.b16 %v121
    %v642 = vunpack.c.h.b16 %v121
    %v643 = vunpack.c.l.b16 %v122
    %v644 = vunpack.c.h.b16 %v122
    %v645 = vunpack.c.l.b16 %v123
    %v646 = vunpack.c.h.b16 %v123
    %v647 = vunpack.c.l.b16 %v124
    %v648 = vunpack.c.h.b16 %v124
    %v649 = vunpack.c.l.b16 %v125
    %v650 = vunpack.c.h.b16 %v125
    %v651 = vunpack.c.l.b16 %v126
    %v652 = vunpack.c.h.b16 %v126
    %v653 = vunpack.c.l.b16 %v127
    %v654 = vunpack.c.h.b16 %v127
    %v655 = vunpack.c.l.b16 %v128
    %v656 = vunpack.c.h.b16 %v128
    %v657 = vunpack.c.l.b16 %v129
    %v658 = vunpack.c.h.b16 %v129
    %v659 = vunpack.c.l.b16 %v130
    %v660 = vunpack.c.h.b16 %v130
    %v661 = vunpack.c.l.b16 %v131
    %v662 = vunpack.c.h.b16 %v131
    %v663 = vunpack.c.l.b16 %v132
    %v664 = vunpack.c.h.b16 %v132
    %v665 = vunpack.c.l.b16 %v133
    %v666 = vunpack.c.h.b16 %v133
    %v667 = vunpack.c.l.b16 %v134
    %v668 = vunpack.c.h.b16 %v134
    %v669 = vunpack.c.l.b16 %v135
    %v670 = vunpack.c.h.b16 %v135
    %v671 = vunpack.c.l.b16 %v136
    %v672 = vunpack.c.h.b16 %v136
    %v673 = vunpack.c.l.b16 %v137
    %v674 = vunpack.c.h.b16 %v137
    %v675 = vunpack.c.l.b16 %v138
    %v676 = vunpack.c.h.b16 %v138
    %v677 = vunpack.c.l.b16 %v139
    %v678 = vunpack.c.h.b16 %v139
    %v679 = vunpack.c.l.b16 %v140
    %v680 = vunpack.c.h.b16 %v140
    %v681 = vunpack.c.l.b16 %v141
    %v682 = vunpack.c.h.b16 %v141
    %v683 = vunpack.c.l.b16 %v142
    %v684 = vunpack.c.h.b16 %v142
    %v685 = vunpack.c.l.b16 %v143
    %v686 = vunpack.c.h.b16 %v143
    %v687 = vunpack.c.l.b16 %v144
    %v688 = vunpack.c.h.b16 %v144
    %v689 = vunpack.c.l.b16 %v145
    %v690 = vunpack.c.h.b16 %v145
    %v691 = vunpack.c.l.b16 %v146
    %v692 = vunpack.c.h.b16 %v146
    %v693 = vunpack.c.l.b16 %v147
    %v694 = vunpack.c.h.b16 %v147
    %v695 = vunpack.c.l.b16 %v148
    %v696 = vunpack.c.h.b16 %v148
    %v697 = vunpack.c.l.b16 %v149
    %v698 = vunpack.c.h.b16 %v149
    %v699 = vunpack.c.l.b16 %v150
    %v700 = vunpack.c.h.b16 %v150
    %v701 = vunpack.c.l.b16 %v151
    %v702 = vunpack.c.h.b16 %v151
    %v703 = vunpack.c.l.b16 %v152
    %v704 = vunpack.c.h.b16 %v152
    %v705 = vunpack.c.l.b16 %v153
    %v706 = vunpack.c.h.b16 %v153
    %v707 = vunpack.c.l.b16 %v154
    %v708 = vunpack.c.h.b16 %v154
    %v709 = vunpack.c.l.b16 %v155
    %v710 = vunpack.c.h.b16 %v155
    %v711 = vunpack.c.l.b16 %v156
    %v712 = vunpack.c.h.b16 %v156
    %v713 = vunpack.c.l.b16 %v157
    %v714 = vunpack.c.h.b16 %v157
    %v715 = vunpack.c.l.b16 %v158
    %v716 = vunpack.c.h.b16 %v158
    %v717 = vunpack.c.l.b16 %v159
    %v718 = vunpack.c.h.b16 %v159
    %v719 = vunpack.c.l.b16 %v160
    %v720 = vunpack.c.h.b16 %v160
    %v721 = vunpack.c.l.b16 %v161
    %v722 = vunpack.c.h.b16 %v161
    %v723 = vunpack.c.l.b16 %v162
    %v724 = vunpack.c.h.b16 %v162
    %v725 = vunpack.c.l.b16 %v163
    %v726 = vunpack.c.h.b16 %v163
    %v727 = vunpack.c.l.b16 %v164
    %v728 = vunpack.c.h.b16 %v164
    %v729 = vunpack.c.l.b16 %v165
    %v730 = vunpack.c.h.b16 %v165
    %v731 = vunpack.c.l.b16 %v166
    %v732 = vunpack.c.h.b16 %v166
    %v733 = vunpack.c.l.b16 %v167
    %v734 = vunpack.c.h.b16 %v167
    %v735 = vunpack.c.l.b16 %v168
    %v736 = vunpack.c.h.b16 %v168
    %v737 = vunpack.c.l.b16 %v169
    %v738 = vunpack.c.h.b16 %v169
    %v739 = vunpack.c.l.b16 %v170
    %v740 = vunpack.c.h.b16 %v170
    %v741 = vunpack.c.l.b16 %v171
    %v742 = vunpack.c.h.b16 %v171
    %v743 = vunpack.c.l.b16 %v172
    %v744 = vunpack.c.h.b16 %v172
    %v745 = vunpack.c.l.b16 %v173
    %v746 = vunpack.c.h.b16 %v173
    %v747 = vunpack.c.l.b16 %v174
    %v748 = vunpack.c.h.b16 %v174
    %v749 = vunpack.c.l.b16 %v175
    %v750 = vunpack.c.h.b16 %v175
    %v751 = vunpack.c.l.b16 %v176
    %v752 = vunpack.c.h.b16 %v176
    %v753 = vunpack.c.l.b16 %v177
    %v754 = vunpack.c.h.b16 %v177
    %v755 = vunpack.c.l.b16 %v178
    %v756 = vunpack.c.h.b16 %v178
    %v757 = vunpack.c.l.b16 %v179
    %v758 = vunpack.c.h.b16 %v179
    %v759 = vunpack.c.l.b16 %v180
    %v760 = vunpack.c.h.b16 %v180
    %v761 = vunpack.c.l.b16 %v181
    %v762 = vunpack.c.h.b16 %v181
    %v763 = vunpack.c.l.b16 %v182
    %v764 = vunpack.c.h.b16 %v182
    %v765 = vunpack.c.l.b16 %v183
    %v766 = vunpack.c.h.b16 %v183
    %v767 = vunpack.c.l.b16 %v184
    %v768 = vunpack.c.h.b16 %v184
    %v769 = vunpack.c.l.b16 %v185
    %v770 = vunpack.c.h.b16 %v185
    %v771 = vunpack.c.l.b16 %v186
    %v772 = vunpack.c.h.b16 %v186
    %v773 = vunpack.c.l.b16 %v187
    %v774 = vunpack.c.h.b16 %v187
    %v775 = vunpack.c.l.b16 %v188
    %v776 = vunpack.c.h.b16 %v188
    %v777 = vunpack.c.l.b16 %v189
    %v778 = vunpack.c.h.b16 %v189
    %v779 = vunpack.c.l.b16 %v190
    %v780 = vunpack.c.h.b16 %v190
    %v781 = vunpack.c.l.b16 %v191
    %v782 = vunpack.c.h.b16 %v191
    %v783 = vunpack.c.l.b16 %v192
    %v784 = vunpack.c.h.b16 %v192
    %v785 = vunpack.c.l.b16 %v193
    %v786 = vunpack.c.h.b16 %v193
    %v787 = vunpack.c.l.b16 %v194
    %v788 = vunpack.c.h.b16 %v194
    %v789 = vunpack.c.l.b16 %v195
    %v790 = vunpack.c.h.b16 %v195
    %v791 = vunpack.c.l.b16 %v196
    %v792 = vunpack.c.h.b16 %v196
    %v793 = vunpack.c.l.b16 %v197
    %v794 = vunpack.c.h.b16 %v197
    %v795 = vunpack.c.l.b16 %v198
    %v796 = vunpack.c.h.b16 %v198
    %v797 = vunpack.c.l.b16 %v199
    %v798 = vunpack.c.h.b16 %v199
    %v799 = vunpack.c.l.b16 %v200
    %v800 = vunpack.c.h.b16 %v200
    %v801 = vunpack.c.l.b16 %v201
    %v802 = vunpack.c.h.b16 %v201
    %v803 = vunpack.c.l.b16 %v202
    %v804 = vunpack.c.h.b16 %v202
    %v805 = vunpack.c.l.b16 %v203
    %v806 = vunpack.c.h.b16 %v203
    %v807 = vunpack.c.l.b16 %v204
    %v808 = vunpack.c.h.b16 %v204
    %v809 = vunpack.c.l.b16 %v205
    %v810 = vunpack.c.h.b16 %v205
    %v811 = vunpack.c.l.b16 %v206
    %v812 = vunpack.c.h.b16 %v206
    %v813 = vunpack.c.l.b16 %v207
    %v814 = vunpack.c.h.b16 %v207
    %v815 = vunpack.c.l.b16 %v208
    %v816 = vunpack.c.h.b16 %v208
    %v817 = vunpack.c.l.b16 %v209
    %v818 = vunpack.c.h.b16 %v209
    %v819 = vunpack.c.l.b16 %v210
    %v820 = vunpack.c.h.b16 %v210
    %v821 = vunpack.c.l.b16 %v211
    %v822 = vunpack.c.h.b16 %v211
    %v823 = vunpack.c.l.b16 %v212
    %v824 = vunpack.c.h.b16 %v212
    %v825 = vunpack.c.l.b16 %v213
    %v826 = vunpack.c.h.b16 %v213
    %v827 = vunpack.c.l.b16 %v214
    %v828 = vunpack.c.h.b16 %v214
    %v829 = vunpack.c.l.b16 %v215
    %v830 = vunpack.c.h.b16 %v215
    %v831 = vunpack.c.l.b16 %v216
    %v832 = vunpack.c.h.b16 %v216
    %v833 = vunpack.c.l.b16 %v217
    %v834 = vunpack.c.h.b16 %v217
    %v835 = vunpack.c.l.b16 %v218
    %v836 = vunpack.c.h.b16 %v218
    %v837 = vunpack.c.l.b16 %v219
    %v838 = vunpack.c.h.b16 %v219
    %v839 = vunpack.c.l.b16 %v220
    %v840 = vunpack.c.h.b16 %v220
    %v841 = vunpack.c.l.b16 %v221
    %v842 = vunpack.c.h.b16 %v221
    %v843 = vunpack.c.l.b16 %v222
    %v844 = vunpack.c.h.b16 %v222
    %v845 = vunpack.c.l.b16 %v223
    %v846 = vunpack.c.h.b16 %v223
    %v847 = vunpack.c.l.b16 %v224
    %v848 = vunpack.c.h.b16 %v224
    %v849 = vunpack.c.l.b16 %v225
    %v850 = vunpack.c.h.b16 %v225
    %v851 = vunpack.c.l.b16 %v226
    %v852 = vunpack.c.h.b16 %v226
    %v853 = vunpack.c.l.b16 %v227
    %v854 = vunpack.c.h.b16 %v227
    %v855 = vunpack.c.l.b16 %v228
    %v856 = vunpack.c.h.b16 %v228
    %v857 = vunpack.c.l.b16 %v229
    %v858 = vunpack.c.h.b16 %v229
    %v859 = vunpack.c.l.b16 %v230
    %v860 = vunpack.c.h.b16 %v230
    %v861 = vunpack.c.l.b16 %v231
    %v862 = vunpack.c.h.b16 %v231
    %v863 = vunpack.c.l.b16 %v232
    %v864 = vunpack.c.h.b16 %v232
    %v865 = vunpack.c.l.b16 %v233
    %v866 = vunpack.c.h.b16 %v233
    %v867 = vunpack.c.l.b16 %v234
    %v868 = vunpack.c.h.b16 %v234
    %v869 = vpack.c.b16 %v481, %v477
    %v870 = vpack.c.b16 %v482, %v478
    %v871 = vpack.c.b16 %v483, %v479
    %v872 = vpack.c.b16 %v484, %v480
    %v873 = vpack.c.b16 %v489, %v485
    %v874 = vpack.c.b16 %v490, %v486
    %v875 = vpack.c.b16 %v491, %v487
    %v876 = vpack.c.b16 %v492, %v488
    %v877 = vpack.c.b16 %v497, %v493
    %v878 = vpack.c.b16 %v498, %v494
    %v879 = vpack.c.b16 %v499, %v495
    %v880 = vpack.c.b16 %v500, %v496
    %v881 = vpack.c.b16 %v505, %v501
    %v882 = vpack.c.b16 %v506, %v502
    %v883 = vpack.c.b16 %v507, %v503
    %v884 = vpack.c.b16 %v508, %v504
    %v885 = vpack.c.b16 %v513, %v509
    %v886 = vpack.c.b16 %v514, %v510
    %v887 = vpack.c.b16 %v515, %v511
    %v888 = vpack.c.b16 %v516, %v512
    %v889 = vpack.c.b16 %v521, %v517
    %v890 = vpack.c.b16 %v522, %v518
    %v891 = vpack.c.b16 %v523, %v519
    %v892 = vpack.c.b16 %v524, %v520
    %v893 = vpack.c.b16 %v529, %v525
    %v894 = vpack.c.b16 %v530, %v526
    %v895 = vpack.c.b16 %v531, %v527
    %v896 = vpack.c.b16 %v532, %v528
    %v897 = vpack.c.b16 %v537, %v533
    %v898 = vpack.c.b16 %v538, %v534
    %v899 = vpack.c.b16 %v539, %v535
    %v900 = vpack.c.b16 %v540, %v536
    %v901 = vpack.c.b16 %v545, %v541
    %v902 = vpack.c.b16 %v546, %v542
    %v903 = vpack.c.b16 %v547, %v543
    %v904 = vpack.c.b16 %v548, %v544
    %v905 = vpack.c.b16 %v553, %v549
    %v906 = vpack.c.b16 %v554, %v550
    %v907 = vpack.c.b16 %v555, %v551
    %v908 = vpack.c.b16 %v556, %v552
    %v909 = vpack.c.b16 %v561, %v557
    %v910 = vpack.c.b16 %v562, %v558
    %v911 = vpack.c.b16 %v563, %v559
    %v912 = vpack.c.b16 %v564, %v560
    %v913 = vpack.c.b16 %v569, %v565
    %v914 = vpack.c.b16 %v570, %v566
    %v915 = vpack.c.b16 %v571, %v567
    %v916 = vpack.c.b16 %v572, %v568
    %v917 = vpack.c.b16 %v577, %v573
    %v918 = vpack.c.b16 %v578, %v574
    %v919 = vpack.c.b16 %v579, %v575
    %v920 = vpack.c.b16 %v580, %v576
    %v921 = vpack.c.b16 %v585, %v581
    %v922 = vpack.c.b16 %v586, %v582
    %v923 = vpack.c.b16 %v587, %v583
    %v924 = vpack.c.b16 %v588, %v584
    %v925 = vpack.c.b16 %v593, %v589
    %v926 = vpack.c.b16 %v594, %v590
    %v927 = vpack.c.b16 %v595, %v591
    %v928 = vpack.c.b16 %v596, %v592
    %v929 = vpack.c.b16 %v601, %v597
    %v930 = vpack.c.b16 %v602, %v598
    %v931 = vpack.c.b16 %v603, %v599
    %v932 = vpack.c.b16 %v604, %v600
    %v933 = vpack.c.b16 %v609, %v605
    %v934 = vpack.c.b16 %v610, %v606
    %v935 = vpack.c.b16 %v611, %v607
    %v936 = vpack.c.b16 %v612, %v608
    %v937 = vpack.c.b16 %v617, %v613
    %v938 = vpack.c.b16 %v618, %v614
    %v939 = vpack.c.b16 %v619, %v615
    %v940 = vpack.c.b16 %v620, %v616
    %v941 = vpack.c.b16 %v625, %v621
    %v942 = vpack.c.b16 %v626, %v622
    %v943 = vpack.c.b16 %v627, %v623
    %v944 = vpack.c.b16 %v628, %v624
    %v945 = vpack.c.b16 %v633, %v629
    %v946 = vpack.c.b16 %v634, %v630
    %v947 = vpack.c.b16 %v635, %v631
    %v948 = vpack.c.b16 %v636, %v632
    %v949 = vpack.c.b16 %v641, %v637
    %v950 = vpack.c.b16 %v642, %v638
    %v951 = vpack.c.b16 %v643, %v639
    %v952 = vpack.c.b16 %v644, %v640
    %v953 = vpack.c.b16 %v649, %v645
    %v954 = vpack.c.b16 %v650, %v646
    %v955 = vpack.c.b16 %v651, %v647
    %v956 = vpack.c.b16 %v652, %v648
    %v957 = vpack.c.b16 %v657, %v653
    %v958 = vpack.c.b16 %v658, %v654
    %v959 = vpack.c.b16 %v659, %v655
    %v960 = vpack.c.b16 %v660, %v656
    %v961 = vpack.c.b16 %v665, %v661
    %v962 = vpack.c.b16 %v666, %v662
    %v963 = vpack.c.b16 %v667, %v663
    %v964 = vpack.c.b16 %v668, %v664
    %v965 = vpack.c.b16 %v673, %v669
    %v966 = vpack.c.b16 %v674, %v670
    %v967 = vpack.c.b16 %v675, %v671
    %v968 = vpack.c.b16 %v676, %v672
    %v969 = vpack.c.b16 %v681, %v677
    %v970 = vpack.c.b16 %v682, %v678
    %v971 = vpack.c.b16 %v683, %v679
    %v972 = vpack.c.b16 %v684, %v680
    %v973 = vpack.c.b16 %v689, %v685
    %v974 = vpack.c.b16 %v690, %v686
    %v975 = vpack.c.b16 %v691, %v687
    %v976 = vpack.c.b16 %v692, %v688
    %v977 = vpack.c.b16 %v697, %v693
    %v978 = vpack.c.b16 %v698, %v694
    %v979 = vpack.c.b16 %v699, %v695
    %v980 = vpack.c.b16 %v700, %v696
    %v981 = vpack.c.b16 %v705, %v701
    %v982 = vpack.c.b16 %v706, %v702
    %v983 = vpack.c.b16 %v707, %v703
    %v984 = vpack.c.b16 %v708, %v704
    %v985 = vpack.c.b16 %v713, %v709
    %v986 = vpack.c.b16 %v714, %v710
    %v987 = vpack.c.b16 %v715, %v711
    %v988 = vpack.c.b16 %v716, %v712
    %v989 = vpack.c.b16 %v721, %v717
    %v990 = vpack.c.b16 %v722, %v718
    %v991 = vpack.c.b16 %v723, %v719
    %v992 = vpack.c.b16 %v724, %v720
    %v993 = vpack.c.b16 %v729, %v725
    %v994 = vpack.c.b16 %v730, %v726
    %v995 = vpack.c.b16 %v731, %v727
    %v996 = vpack.c.b16 %v732, %v728
    %v997 = vpack.c.b16 %v737, %v733
    %v998 = vpack.c.b16 %v738, %v734
    %v999 = vpack.c.b16 %v739, %v735
    %v1000 = vpack.c.b16 %v740, %v736
    %v1001 = vpack.c.b16 %v745, %v741
    %v1002 = vpack.c.b16 %v746, %v742
    %v1003 = vpack.c.b16 %v747, %v743
    %v1004 = vpack.c.b16 %v748, %v744
    %v1005 = vpack.c.b16 %v753, %v749
    %v1006 = vpack.c.b16 %v754, %v750
    %v1007 = vpack.c.b16 %v755, %v751
    %v1008 = vpack.c.b16 %v756, %v752
    %v1009 = vpack.c.b16 %v761, %v757
    %v1010 = vpack.c.b16 %v762, %v758
    %v1011 = vpack.c.b16 %v763, %v759
    %v1012 = vpack.c.b16 %v764, %v760
    %v1013 = vpack.c.b16 %v769, %v765
    %v1014 = vpack.c.b16 %v770, %v766
    %v1015 = vpack.c.b16 %v771, %v767
    %v1016 = vpack.c.b16 %v772, %v768
    %v1017 = vpack.c.b16 %v777, %v773
    %v1018 = vpack.c.b16 %v778, %v774
    %v1019 = vpack.c.b16 %v779, %v775
    %v1020 = vpack.c.b16 %v780, %v776
    %v1021 = vpack.c.b16 %v785, %v781
    %v1022 = vpack.c.b16 %v786, %v782
    %v1023 = vpack.c.b16 %v787, %v783
    %v1024 = vpack.c.b16 %v788, %v784
    %v1025 = vpack.c.b16 %v793, %v789
    %v1026 = vpack.c.b16 %v794, %v790
    %v1027 = vpack.c.b16 %v795, %v791
    %v1028 = vpack.c.b16 %v796, %v792
    %v1029 = vpack.c.b16 %v801, %v797
    %v1030 = vpack.c.b16 %v802, %v798
    %v1031 = vpack.c.b16 %v803, %v799
    %v1032 = vpack.c.b16 %v804, %v800
    %v1033 = vpack.c.b16 %v809, %v805
    %v1034 = vpack.c.b16 %v810, %v806
    %v1035 = vpack.c.b16 %v811, %v807
    %v1036 = vpack.c.b16 %v812, %v808
    %v1037 = vpack.c.b16 %v817, %v813
    %v1038 = vpack.c.b16 %v818, %v814
    %v1039 = vpack.c.b16 %v819, %v815
    %v1040 = vpack.c.b16 %v820, %v816
    %v1041 = vpack.c.b16 %v825, %v821
    %v1042 = vpack.c.b16 %v826, %v822
    %v1043 = vpack.c.b16 %v827, %v823
    %v1044 = vpack.c.b16 %v828, %v824
    %v1045 = vpack.c.b16 %v833, %v829
    %v1046 = vpack.c.b16 %v834, %v830
    %v1047 = vpack.c.b16 %v835, %v831
    %v1048 = vpack.c.b16 %v836, %v832
    %v1049 = vpack.c.b16 %v841, %v837
    %v1050 = vpack.c.b16 %v842, %v838
    %v1051 = vpack.c.b16 %v843, %v839
    %v1052 = vpack.c.b16 %v844, %v840
    %v1053 = vpack.c.b16 %v849, %v845
    %v1054 = vpack.c.b16 %v850, %v846
    %v1055 = vpack.c.b16 %v851, %v847
    %v1056 = vpack.c.b16 %v852, %v848
    %v1057 = vpack.c.b16 %v857, %v853
    %v1058 = vpack.c.b16 %v858, %v854
    %v1059 = vpack.c.b16 %v859, %v855
    %v1060 = vpack.c.b16 %v860, %v856
    %v1061 = vpack.c.b16 %v865, %v861
    %v1062 = vpack.c.b16 %v866, %v862
    %v1063 = vpack.c.b16 %v867, %v863
    %v1064 = vpack.c.b16 %v868, %v864
    %vm1261 = vcmask 130048
    %v1263 = vsel %vm1261, %v274, 0
    %1265 = vmatprep.subr.bf16.mxu0 %v870
    %1266 = vmatpush1.bf16.msra.mxu0 %v869
    %1267 = vmatprep.subr.bf16.mxu0 %v874
    %1268 = vmatpush1.bf16.msra.mxu0 %v873
    %1269 = vmatprep.subr.bf16.mxu0 %v878
    %1270 = vmatpush1.bf16.msra.mxu0 %v877
    %1271 = vmatprep.subr.bf16.mxu0 %v882
    %1272 = vmatpush1.bf16.msra.mxu0 %v881
    %1273 = vmatprep.subr.bf16.mxu0 %v886
    %1274 = vmatpush1.bf16.msra.mxu0 %v885
    %1275 = vmatprep.subr.bf16.mxu0 %v890
    %1276 = vmatpush1.bf16.msra.mxu0 %v889
    %1277 = vmatprep.subr.bf16.mxu0 %v894
    %1278 = vmatpush1.bf16.msra.mxu0 %v893
    %1279 = vmatprep.subr.bf16.mxu0 %v898
    %1280 = vmatpush1.bf16.msra.mxu0 %v897
    %1281 = vmatprep.subr.bf16.mxu0 %v902
    %1282 = vmatpush1.bf16.msra.mxu0 %v901
    %1283 = vmatprep.subr.bf16.mxu0 %v906
    %1284 = vmatpush1.bf16.msra.mxu0 %v905
    %1285 = vmatprep.subr.bf16.mxu0 %v910
    %1286 = vmatpush1.bf16.msra.mxu0 %v909
    %1287 = vmatprep.subr.bf16.mxu0 %v914
    %1288 = vmatpush1.bf16.msra.mxu0 %v913
    %1289 = vmatprep.subr.bf16.mxu0 %v918
    %1290 = vmatpush1.bf16.msra.mxu0 %v917
    %1291 = vmatprep.subr.bf16.mxu0 %v922
    %1292 = vmatpush1.bf16.msra.mxu0 %v921
    %1293 = vmatprep.subr.bf16.mxu0 %v926
    %1294 = vmatpush1.bf16.msra.mxu0 %v925
    %1295 = vmatprep.subr.bf16.mxu0 %v930
    %1296 = vmatpush1.bf16.msra.mxu0 %v929
    %1297 = vmatprep.mubr.bf16.mxu0 %v269
    %1298 = vmatmul.mubr.bf16.gmra.mrb[0].mxu0 %v268
    %v1299 = vpop.f32.mrb[0].mxu0
    %v1300 = vadd.f32 %v240, %v1299
    %v1301 = vpop.f32.mrb[0].mxu0
    %v1302 = vadd.f32 %v244, %v1301
    %v1303 = vpop.f32.mrb[0].mxu0
    %v1304 = vpop.f32.mrb[0].mxu0
    %1305 = vdwg.mxu0
    %1306 = vmatprep.subr.bf16.mxu0 %v934
    %1307 = vmatpush1.bf16.msra.mxu0 %v933
    %1308 = vmatprep.subr.bf16.mxu0 %v938
    %1309 = vmatpush1.bf16.msra.mxu0 %v937
    %1310 = vmatprep.subr.bf16.mxu0 %v942
    %1311 = vmatpush1.bf16.msra.mxu0 %v941
    %1312 = vmatprep.subr.bf16.mxu0 %v946
    %1313 = vmatpush1.bf16.msra.mxu0 %v945
    %1314 = vmatprep.subr.bf16.mxu0 %v950
    %1315 = vmatpush1.bf16.msra.mxu0 %v949
    %1316 = vmatprep.subr.bf16.mxu0 %v954
    %1317 = vmatpush1.bf16.msra.mxu0 %v953
    %1318 = vmatprep.subr.bf16.mxu0 %v958
    %1319 = vmatpush1.bf16.msra.mxu0 %v957
    %1320 = vmatprep.subr.bf16.mxu0 %v962
    %1321 = vmatpush1.bf16.msra.mxu0 %v961
    %1322 = vmatprep.subr.bf16.mxu0 %v966
    %1323 = vmatpush1.bf16.msra.mxu0 %v965
    %1324 = vmatprep.subr.bf16.mxu0 %v970
    %1325 = vmatpush1.bf16.msra.mxu0 %v969
    %1326 = vmatprep.subr.bf16.mxu0 %v974
    %1327 = vmatpush1.bf16.msra.mxu0 %v973
    %1328 = vmatprep.subr.bf16.mxu0 %v978
    %1329 = vmatpush1.bf16.msra.mxu0 %v977
    %1330 = vmatprep.subr.bf16.mxu0 %v982
    %1331 = vmatpush1.bf16.msra.mxu0 %v981
    %1332 = vmatprep.subr.bf16.mxu0 %v986
    %1333 = vmatpush1.bf16.msra.mxu0 %v985
    %1334 = vmatprep.subr.bf16.mxu0 %v990
    %1335 = vmatpush1.bf16.msra.mxu0 %v989
    %1336 = vmatprep.subr.bf16.mxu0 %v994
    %1337 = vmatpush1.bf16.msra.mxu0 %v993
    %1338 = vmatprep.mubr.bf16.mxu0 %v271
    %1339 = vmatmul.mubr.bf16.gmra.mrb[0].mxu0 %v270
    %v1340 = vpop.f32.mrb[0].mxu0
    %v1341 = vadd.f32 %v1300, %v1340
    %v1342 = vpop.f32.mrb[0].mxu0
    %v1343 = vadd.f32 %v1302, %v1342
    %v1344 = vpop.f32.mrb[0].mxu0
    %v1345 = vpop.f32.mrb[0].mxu0
    %1346 = vdwg.mxu0
    %1347 = vmatprep.subr.bf16.mxu0 %v998
    %1348 = vmatpush1.bf16.msra.mxu0 %v997
    %1349 = vmatprep.subr.bf16.mxu0 %v1002
    %1350 = vmatpush1.bf16.msra.mxu0 %v1001
    %1351 = vmatprep.subr.bf16.mxu0 %v1006
    %1352 = vmatpush1.bf16.msra.mxu0 %v1005
    %1353 = vmatprep.subr.bf16.mxu0 %v1010
    %1354 = vmatpush1.bf16.msra.mxu0 %v1009
    %1355 = vmatprep.subr.bf16.mxu0 %v1014
    %1356 = vmatpush1.bf16.msra.mxu0 %v1013
    %1357 = vmatprep.subr.bf16.mxu0 %v1018
    %1358 = vmatpush1.bf16.msra.mxu0 %v1017
    %1359 = vmatprep.subr.bf16.mxu0 %v1022
    %1360 = vmatpush1.bf16.msra.mxu0 %v1021
    %1361 = vmatprep.subr.bf16.mxu0 %v1026
    %1362 = vmatpush1.bf16.msra.mxu0 %v1025
    %1363 = vmatprep.subr.bf16.mxu0 %v1030
    %1364 = vmatpush1.bf16.msra.mxu0 %v1029
    %1365 = vmatprep.subr.bf16.mxu0 %v1034
    %1366 = vmatpush1.bf16.msra.mxu0 %v1033
    %1367 = vmatprep.subr.bf16.mxu0 %v1038
    %1368 = vmatpush1.bf16.msra.mxu0 %v1037
    %1369 = vmatprep.subr.bf16.mxu0 %v1042
    %1370 = vmatpush1.bf16.msra.mxu0 %v1041
    %1371 = vmatprep.subr.bf16.mxu0 %v1046
    %1372 = vmatpush1.bf16.msra.mxu0 %v1045
    %1373 = vmatprep.subr.bf16.mxu0 %v1050
    %1374 = vmatpush1.bf16.msra.mxu0 %v1049
    %1375 = vmatprep.subr.bf16.mxu0 %v1054
    %1376 = vmatpush1.bf16.msra.mxu0 %v1053
    %1377 = vmatprep.subr.bf16.mxu0 %v1058
    %1378 = vmatpush1.bf16.msra.mxu0 %v1057
    %1379 = vmatprep.mubr.bf16.mxu0 %v273
    %1380 = vmatmul.mubr.bf16.gmra.mrb[0].mxu0 %v272
    %v1381 = vpop.f32.mrb[0].mxu0
    %v1382 = vadd.f32 %v1341, %v1381
    %v1383 = vpop.f32.mrb[0].mxu0
    %v1384 = vadd.f32 %v1343, %v1383
    %v1385 = vpop.f32.mrb[0].mxu0
    %v1386 = vpop.f32.mrb[0].mxu0
    %1387 = vdwg.mxu0
    %1388 = vmatprep.subr.bf16.mxu0 %v1062
    %1389 = vmatpush1.bf16.msra.mxu0 %v1061
    %1390 = vmatprep.subr.bf16.mxu0 0
    %1391 = vmatpush1.bf16.msra.mxu0 0
    %1392 = vmatprep.subr.bf16.mxu0 0
    %1393 = vmatpush1.bf16.msra.mxu0 0
    %1394 = vmatprep.subr.bf16.mxu0 0
    %1395 = vmatpush1.bf16.msra.mxu0 0
    %1396 = vmatprep.subr.bf16.mxu0 0
    %1397 = vmatpush1.bf16.msra.mxu0 0
    %1398 = vmatprep.subr.bf16.mxu0 0
    %1399 = vmatpush1.bf16.msra.mxu0 0
    %1400 = vmatprep.subr.bf16.mxu0 0
    %1401 = vmatpush1.bf16.msra.mxu0 0
    %1402 = vmatprep.subr.bf16.mxu0 0
    %1403 = vmatpush1.bf16.msra.mxu0 0
    %1404 = vmatprep.subr.bf16.mxu0 0
    %1405 = vmatpush1.bf16.msra.mxu0 0
    %1406 = vmatprep.subr.bf16.mxu0 0
    %1407 = vmatpush1.bf16.msra.mxu0 0
    %1408 = vmatprep.subr.bf16.mxu0 0
    %1409 = vmatpush1.bf16.msra.mxu0 0
    %1410 = vmatprep.subr.bf16.mxu0 0
    %1411 = vmatpush1.bf16.msra.mxu0 0
    %1412 = vmatprep.subr.bf16.mxu0 0
    %1413 = vmatpush1.bf16.msra.mxu0 0
    %1414 = vmatprep.subr.bf16.mxu0 0
    %1415 = vmatpush1.bf16.msra.mxu0 0
    %1416 = vmatprep.subr.bf16.mxu0 0
    %1417 = vmatpush1.bf16.msra.mxu0 0
    %1418 = vmatprep.subr.bf16.mxu0 0
    %1419 = vmatpush1.bf16.msra.mxu0 0
    %1420 = vmatprep.mubr.bf16.mxu0 0
    %1421 = vmatmul.mubr.bf16.gmra.mrb[0].mxu0 %v1263
    %v1422 = vpop.f32.mrb[0].mxu0
    %v1423 = vadd.f32 %v1382, %v1422
    %v1424 = vpop.f32.mrb[0].mxu0
    %v1425 = vadd.f32 %v1384, %v1424
    %v1426 = vpop.f32.mrb[0].mxu0
    %v1427 = vpop.f32.mrb[0].mxu0
    %1428 = vdwg.mxu0
    %1429 = vmatprep.subr.bf16.mxu0 %v872
    %1430 = vmatpush1.bf16.msra.mxu0 %v871
    %1431 = vmatprep.subr.bf16.mxu0 %v876
    %1432 = vmatpush1.bf16.msra.mxu0 %v875
    %1433 = vmatprep.subr.bf16.mxu0 %v880
    %1434 = vmatpush1.bf16.msra.mxu0 %v879
    %1435 = vmatprep.subr.bf16.mxu0 %v884
    %1436 = vmatpush1.bf16.msra.mxu0 %v883
    %1437 = vmatprep.subr.bf16.mxu0 %v888
    %1438 = vmatpush1.bf16.msra.mxu0 %v887
    %1439 = vmatprep.subr.bf16.mxu0 %v892
    %1440 = vmatpush1.bf16.msra.mxu0 %v891
    %1441 = vmatprep.subr.bf16.mxu0 %v896
    %1442 = vmatpush1.bf16.msra.mxu0 %v895
    %1443 = vmatprep.subr.bf16.mxu0 %v900
    %1444 = vmatpush1.bf16.msra.mxu0 %v899
    %1445 = vmatprep.subr.bf16.mxu0 %v904
    %1446 = vmatpush1.bf16.msra.mxu0 %v903
    %1447 = vmatprep.subr.bf16.mxu0 %v908
    %1448 = vmatpush1.bf16.msra.mxu0 %v907
    %1449 = vmatprep.subr.bf16.mxu0 %v912
    %1450 = vmatpush1.bf16.msra.mxu0 %v911
    %1451 = vmatprep.subr.bf16.mxu0 %v916
    %1452 = vmatpush1.bf16.msra.mxu0 %v915
    %1453 = vmatprep.subr.bf16.mxu0 %v920
    %1454 = vmatpush1.bf16.msra.mxu0 %v919
    %1455 = vmatprep.subr.bf16.mxu0 %v924
    %1456 = vmatpush1.bf16.msra.mxu0 %v923
    %1457 = vmatprep.subr.bf16.mxu0 %v928
    %1458 = vmatpush1.bf16.msra.mxu0 %v927
    %1459 = vmatprep.subr.bf16.mxu0 %v932
    %1460 = vmatpush1.bf16.msra.mxu0 %v931
    %1461 = vmatprep.mubr.bf16.mxu0 %v269
    %1462 = vmatmul.mubr.bf16.gmra.mrb[0].mxu0 %v268
    %v1463 = vpop.f32.mrb[0].mxu0
    %v1464 = vadd.f32 %v248, %v1463
    %v1465 = vpop.f32.mrb[0].mxu0
    %v1466 = vadd.f32 %v252, %v1465
    %v1467 = vpop.f32.mrb[0].mxu0
    %v1468 = vpop.f32.mrb[0].mxu0
    %1469 = vdwg.mxu0
    %1470 = vmatprep.subr.bf16.mxu0 %v936
    %1471 = vmatpush1.bf16.msra.mxu0 %v935
    %1472 = vmatprep.subr.bf16.mxu0 %v940
    %1473 = vmatpush1.bf16.msra.mxu0 %v939
    %1474 = vmatprep.subr.bf16.mxu0 %v944
    %1475 = vmatpush1.bf16.msra.mxu0 %v943
    %1476 = vmatprep.subr.bf16.mxu0 %v948
    %1477 = vmatpush1.bf16.msra.mxu0 %v947
    %1478 = vmatprep.subr.bf16.mxu0 %v952
    %1479 = vmatpush1.bf16.msra.mxu0 %v951
    %1480 = vmatprep.subr.bf16.mxu0 %v956
    %1481 = vmatpush1.bf16.msra.mxu0 %v955
    %1482 = vmatprep.subr.bf16.mxu0 %v960
    %1483 = vmatpush1.bf16.msra.mxu0 %v959
    %1484 = vmatprep.subr.bf16.mxu0 %v964
    %1485 = vmatpush1.bf16.msra.mxu0 %v963
    %1486 = vmatprep.subr.bf16.mxu0 %v968
    %1487 = vmatpush1.bf16.msra.mxu0 %v967
    %1488 = vmatprep.subr.bf16.mxu0 %v972
    %1489 = vmatpush1.bf16.msra.mxu0 %v971
    %1490 = vmatprep.subr.bf16.mxu0 %v976
    %1491 = vmatpush1.bf16.msra.mxu0 %v975
    %1492 = vmatprep.subr.bf16.mxu0 %v980
    %1493 = vmatpush1.bf16.msra.mxu0 %v979
    %1494 = vmatprep.subr.bf16.mxu0 %v984
    %1495 = vmatpush1.bf16.msra.mxu0 %v983
    %1496 = vmatprep.subr.bf16.mxu0 %v988
    %1497 = vmatpush1.bf16.msra.mxu0 %v987
    %1498 = vmatprep.subr.bf16.mxu0 %v992
    %1499 = vmatpush1.bf16.msra.mxu0 %v991
    %1500 = vmatprep.subr.bf16.mxu0 %v996
    %1501 = vmatpush1.bf16.msra.mxu0 %v995
    %1502 = vmatprep.mubr.bf16.mxu0 %v271
    %1503 = vmatmul.mubr.bf16.gmra.mrb[0].mxu0 %v270
    %v1504 = vpop.f32.mrb[0].mxu0
    %v1505 = vadd.f32 %v1464, %v1504
    %v1506 = vpop.f32.mrb[0].mxu0
    %v1507 = vadd.f32 %v1466, %v1506
    %v1508 = vpop.f32.mrb[0].mxu0
    %v1509 = vpop.f32.mrb[0].mxu0
    %1510 = vdwg.mxu0
    %1511 = vmatprep.subr.bf16.mxu0 %v1000
    %1512 = vmatpush1.bf16.msra.mxu0 %v999
    %1513 = vmatprep.subr.bf16.mxu0 %v1004
    %1514 = vmatpush1.bf16.msra.mxu0 %v1003
    %1515 = vmatprep.subr.bf16.mxu0 %v1008
    %1516 = vmatpush1.bf16.msra.mxu0 %v1007
    %1517 = vmatprep.subr.bf16.mxu0 %v1012
    %1518 = vmatpush1.bf16.msra.mxu0 %v1011
    %1519 = vmatprep.subr.bf16.mxu0 %v1016
    %1520 = vmatpush1.bf16.msra.mxu0 %v1015
    %1521 = vmatprep.subr.bf16.mxu0 %v1020
    %1522 = vmatpush1.bf16.msra.mxu0 %v1019
    %1523 = vmatprep.subr.bf16.mxu0 %v1024
    %1524 = vmatpush1.bf16.msra.mxu0 %v1023
    %1525 = vmatprep.subr.bf16.mxu0 %v1028
    %1526 = vmatpush1.bf16.msra.mxu0 %v1027
    %1527 = vmatprep.subr.bf16.mxu0 %v1032
    %1528 = vmatpush1.bf16.msra.mxu0 %v1031
    %1529 = vmatprep.subr.bf16.mxu0 %v1036
    %1530 = vmatpush1.bf16.msra.mxu0 %v1035
    %1531 = vmatprep.subr.bf16.mxu0 %v1040
    %1532 = vmatpush1.bf16.msra.mxu0 %v1039
    %1533 = vmatprep.subr.bf16.mxu0 %v1044
    %1534 = vmatpush1.bf16.msra.mxu0 %v1043
    %1535 = vmatprep.subr.bf16.mxu0 %v1048
    %1536 = vmatpush1.bf16.msra.mxu0 %v1047
    %1537 = vmatprep.subr.bf16.mxu0 %v1052
    %1538 = vmatpush1.bf16.msra.mxu0 %v1051
    %1539 = vmatprep.subr.bf16.mxu0 %v1056
    %1540 = vmatpush1.bf16.msra.mxu0 %v1055
    %1541 = vmatprep.subr.bf16.mxu0 %v1060
    %1542 = vmatpush1.bf16.msra.mxu0 %v1059
    %1543 = vmatprep.mubr.bf16.mxu0 %v273
    %1544 = vmatmul.mubr.bf16.gmra.mrb[0].mxu0 %v272
    %v1545 = vpop.f32.mrb[0].mxu0
    %v1546 = vadd.f32 %v1505, %v1545
    %v1547 = vpop.f32.mrb[0].mxu0
    %v1548 = vadd.f32 %v1507, %v1547
    %v1549 = vpop.f32.mrb[0].mxu0
    %v1550 = vpop.f32.mrb[0].mxu0
    %1551 = vdwg.mxu0
    %1552 = vmatprep.subr.bf16.mxu0 %v1064
    %1553 = vmatpush1.bf16.msra.mxu0 %v1063
    %1554 = vmatprep.subr.bf16.mxu0 0
    %1555 = vmatpush1.bf16.msra.mxu0 0
    %1556 = vmatprep.subr.bf16.mxu0 0
    %1557 = vmatpush1.bf16.msra.mxu0 0
    %1558 = vmatprep.subr.bf16.mxu0 0
    %1559 = vmatpush1.bf16.msra.mxu0 0
    %1560 = vmatprep.subr.bf16.mxu0 0
    %1561 = vmatpush1.bf16.msra.mxu0 0
    %1562 = vmatprep.subr.bf16.mxu0 0
    %1563 = vmatpush1.bf16.msra.mxu0 0
    %1564 = vmatprep.subr.bf16.mxu0 0
    %1565 = vmatpush1.bf16.msra.mxu0 0
    %1566 = vmatprep.subr.bf16.mxu0 0
    %1567 = vmatpush1.bf16.msra.mxu0 0
    %1568 = vmatprep.subr.bf16.mxu0 0
    %1569 = vmatpush1.bf16.msra.mxu0 0
    %1570 = vmatprep.subr.bf16.mxu0 0
    %1571 = vmatpush1.bf16.msra.mxu0 0
    %1572 = vmatprep.subr.bf16.mxu0 0
    %1573 = vmatpush1.bf16.msra.mxu0 0
    %1574 = vmatprep.subr.bf16.mxu0 0
    %1575 = vmatpush1.bf16.msra.mxu0 0
    %1576 = vmatprep.subr.bf16.mxu0 0
    %1577 = vmatpush1.bf16.msra.mxu0 0
    %1578 = vmatprep.subr.bf16.mxu0 0
    %1579 = vmatpush1.bf16.msra.mxu0 0
    %1580 = vmatprep.subr.bf16.mxu0 0
    %1581 = vmatpush1.bf16.msra.mxu0 0
    %1582 = vmatprep.subr.bf16.mxu0 0
    %1583 = vmatpush1.bf16.msra.mxu0 0
    %1584 = vmatprep.mubr.bf16.mxu0 0
    %1585 = vmatmul.mubr.bf16.gmra.mrb[0].mxu0 %v1263
    %v1586 = vpop.f32.mrb[0].mxu0
    %v1587 = vadd.f32 %v1546, %v1586
    %v1588 = vpop.f32.mrb[0].mxu0
    %v1589 = vadd.f32 %v1548, %v1588
    %v1590 = vpop.f32.mrb[0].mxu0
    %v1591 = vpop.f32.mrb[0].mxu0
    %1592 = vdwg.mxu0
    %v1593 = vpack.c.bf16 %v1423, %v1423
    %v1594 = vpack.c.bf16 %v1425, %v1425
    %v1595 = vpack.c.bf16 %v1587, %v1587
    %v1596 = vpack.c.bf16 %v1589, %v1589
    %v1597 = vxor.u32 %v1593, 2147516416
    %v1598 = vxor.u32 %v1594, 2147516416
    %v1599 = vxor.u32 %v1595, 2147516416
    %v1600 = vxor.u32 %v1596, 2147516416
    %v1602 = vmul.bf16 %v1597, 1069105081
    %v1603 = vpow.bf16.pop %v1602
    %v1605 = vmul.bf16 %v1598, 1069105081
    %v1606 = vpow.bf16.pop %v1605
    %v1608 = vmul.bf16 %v1599, 1069105081
    %v1609 = vpow.bf16.pop %v1608
    %v1611 = vmul.bf16 %v1600, 1069105081
    %v1612 = vpow.bf16.pop %v1611
    %v1613 = vadd.bf16 %v1603, 1065369472
    %v1614 = vadd.bf16 %v1606, 1065369472
    %v1615 = vadd.bf16 %v1609, 1065369472
    %v1616 = vadd.bf16 %v1612, 1065369472
    %v1617 = vrcp.bf16.pop %v1613
    %v1618 = vmul.bf16 1065369472, %v1617
    %v1619 = vrcp.bf16.pop %v1614
    %v1620 = vmul.bf16 1065369472, %v1619
    %v1621 = vrcp.bf16.pop %v1615
    %v1622 = vmul.bf16 1065369472, %v1621
    %v1623 = vrcp.bf16.pop %v1616
    %v1624 = vmul.bf16 1065369472, %v1623
    %v1625 = vld [vmem:[%s3] sm:$0xff]
    %v1626 = vld [vmem:[%s3 + $0x8] sm:$0xff]
    %v1627 = vld [vmem:[%s3 + $0x10] sm:$0xff]
    %v1628 = vld [vmem:[%s3 + $0x18] sm:$0xff]
    %v1629 = vld [vmem:[%s3 + $0x20] sm:$0xff]
    %v1630 = vld [vmem:[%s3 + $0x28] sm:$0xff]
    %v1631 = vld [vmem:[%s3 + $0x30] sm:$0xff]
    %v1632 = vld [vmem:[%s3 + $0x38] sm:$0xff]
    %v1633 = vld [vmem:[%s3 + $0x40] sm:$0xff]
    %v1634 = vld [vmem:[%s3 + $0x48] sm:$0xff]
    %v1635 = vld [vmem:[%s3 + $0x50] sm:$0xff]
    %v1636 = vld [vmem:[%s3 + $0x58] sm:$0xff]
    %v1637 = vld [vmem:[%s3 + $0x60] sm:$0xff]
    %v1638 = vld [vmem:[%s3 + $0x68] sm:$0xff]
    %v1639 = vld [vmem:[%s3 + $0x70] sm:$0xff]
    %v1640 = vld [vmem:[%s3 + $0x78] sm:$0xff]
    %v1641 = vld [vmem:[%s3 + $0x80] sm:$0xff]
    %v1642 = vld [vmem:[%s3 + $0x88] sm:$0xff]
    %v1643 = vld [vmem:[%s3 + $0x90] sm:$0xff]
    %v1644 = vld [vmem:[%s3 + $0x98] sm:$0xff]
    %v1645 = vld [vmem:[%s3 + $0xa0] sm:$0xff]
    %v1646 = vld [vmem:[%s3 + $0xa8] sm:$0xff]
    %v1647 = vld [vmem:[%s3 + $0xb0] sm:$0xff]
    %v1648 = vld [vmem:[%s3 + $0xb8] sm:$0xff]
    %v1649 = vld [vmem:[%s3 + $0xc0] sm:$0xff]
    %v1650 = vld [vmem:[%s3 + $0xc8] sm:$0xff]
    %v1651 = vld [vmem:[%s3 + $0xd0] sm:$0xff]
    %v1652 = vld [vmem:[%s3 + $0xd8] sm:$0xff]
    %v1653 = vld [vmem:[%s3 + $0xe0] sm:$0xff]
    %v1654 = vld [vmem:[%s3 + $0xe8] sm:$0xff]
    %v1655 = vld [vmem:[%s3 + $0xf0] sm:$0xff]
    %v1656 = vld [vmem:[%s3 + $0xf8] sm:$0xff]
    %v1657 = vld [vmem:[%s3 + $0x100] sm:$0xff]
    %v1658 = vld [vmem:[%s3 + $0x108] sm:$0xff]
    %v1659 = vld [vmem:[%s3 + $0x110] sm:$0xff]
    %v1660 = vld [vmem:[%s3 + $0x118] sm:$0xff]
    %v1661 = vld [vmem:[%s3 + $0x120] sm:$0xff]
    %v1662 = vld [vmem:[%s3 + $0x128] sm:$0xff]
    %v1663 = vld [vmem:[%s3 + $0x130] sm:$0xff]
    %v1664 = vld [vmem:[%s3 + $0x138] sm:$0xff]
    %v1665 = vld [vmem:[%s3 + $0x140] sm:$0xff]
    %v1666 = vld [vmem:[%s3 + $0x148] sm:$0xff]
    %v1667 = vld [vmem:[%s3 + $0x150] sm:$0xff]
    %v1668 = vld [vmem:[%s3 + $0x158] sm:$0xff]
    %v1669 = vld [vmem:[%s3 + $0x160] sm:$0xff]
    %v1670 = vld [vmem:[%s3 + $0x168] sm:$0xff]
    %v1671 = vld [vmem:[%s3 + $0x170] sm:$0xff]
    %v1672 = vld [vmem:[%s3 + $0x178] sm:$0xff]
    %v1673 = vld [vmem:[%s3 + $0x180] sm:$0xff]
    %v1674 = vld [vmem:[%s4] sm:$0x3]
    %v1676 = vlaneseq
    %v1677 = vshrl.u32 %v1676, 7
    %v1678 = vsub.s32 0, %v1677
    %v1679 = vrot.slane %v1674, %v1678
    %v1680 = vlaneseq
    %v1681 = vshrl.u32 %v1680, 7
    %v1682 = vsub.s32 1, %v1681
    %v1683 = vrot.slane %v1674, %v1682
    %v1735 = vunpack.c.l.b16 %v1625
    %v1736 = vunpack.c.h.b16 %v1625
    %v1737 = vunpack.c.l.b16 %v1626
    %v1738 = vunpack.c.h.b16 %v1626
    %v1739 = vunpack.c.l.b16 %v1627
    %v1740 = vunpack.c.h.b16 %v1627
    %v1741 = vunpack.c.l.b16 %v1628
    %v1742 = vunpack.c.h.b16 %v1628
    %v1743 = vunpack.c.l.b16 %v1629
    %v1744 = vunpack.c.h.b16 %v1629
    %v1745 = vunpack.c.l.b16 %v1630
    %v1746 = vunpack.c.h.b16 %v1630
    %v1747 = vunpack.c.l.b16 %v1631
    %v1748 = vunpack.c.h.b16 %v1631
    %v1749 = vunpack.c.l.b16 %v1632
    %v1750 = vunpack.c.h.b16 %v1632
    %v1751 = vunpack.c.l.b16 %v1633
    %v1752 = vunpack.c.h.b16 %v1633
    %v1753 = vunpack.c.l.b16 %v1634
    %v1754 = vunpack.c.h.b16 %v1634
    %v1755 = vunpack.c.l.b16 %v1635
    %v1756 = vunpack.c.h.b16 %v1635
    %v1757 = vunpack.c.l.b16 %v1636
    %v1758 = vunpack.c.h.b16 %v1636
    %v1759 = vunpack.c.l.b16 %v1637
    %v1760 = vunpack.c.h.b16 %v1637
    %v1761 = vunpack.c.l.b16 %v1638
    %v1762 = vunpack.c.h.b16 %v1638
    %v1763 = vunpack.c.l.b16 %v1639
    %v1764 = vunpack.c.h.b16 %v1639
    %v1765 = vunpack.c.l.b16 %v1640
    %v1766 = vunpack.c.h.b16 %v1640
    %v1767 = vunpack.c.l.b16 %v1641
    %v1768 = vunpack.c.h.b16 %v1641
    %v1769 = vunpack.c.l.b16 %v1642
    %v1770 = vunpack.c.h.b16 %v1642
    %v1771 = vunpack.c.l.b16 %v1643
    %v1772 = vunpack.c.h.b16 %v1643
    %v1773 = vunpack.c.l.b16 %v1644
    %v1774 = vunpack.c.h.b16 %v1644
    %v1775 = vunpack.c.l.b16 %v1645
    %v1776 = vunpack.c.h.b16 %v1645
    %v1777 = vunpack.c.l.b16 %v1646
    %v1778 = vunpack.c.h.b16 %v1646
    %v1779 = vunpack.c.l.b16 %v1647
    %v1780 = vunpack.c.h.b16 %v1647
    %v1781 = vunpack.c.l.b16 %v1648
    %v1782 = vunpack.c.h.b16 %v1648
    %v1783 = vunpack.c.l.b16 %v1649
    %v1784 = vunpack.c.h.b16 %v1649
    %v1785 = vunpack.c.l.b16 %v1650
    %v1786 = vunpack.c.h.b16 %v1650
    %v1787 = vunpack.c.l.b16 %v1651
    %v1788 = vunpack.c.h.b16 %v1651
    %v1789 = vunpack.c.l.b16 %v1652
    %v1790 = vunpack.c.h.b16 %v1652
    %v1791 = vunpack.c.l.b16 %v1653
    %v1792 = vunpack.c.h.b16 %v1653
    %v1793 = vunpack.c.l.b16 %v1654
    %v1794 = vunpack.c.h.b16 %v1654
    %v1795 = vunpack.c.l.b16 %v1655
    %v1796 = vunpack.c.h.b16 %v1655
    %v1797 = vunpack.c.l.b16 %v1656
    %v1798 = vunpack.c.h.b16 %v1656
    %v1799 = vunpack.c.l.b16 %v1657
    %v1800 = vunpack.c.h.b16 %v1657
    %v1801 = vunpack.c.l.b16 %v1658
    %v1802 = vunpack.c.h.b16 %v1658
    %v1803 = vunpack.c.l.b16 %v1659
    %v1804 = vunpack.c.h.b16 %v1659
    %v1805 = vunpack.c.l.b16 %v1660
    %v1806 = vunpack.c.h.b16 %v1660
    %v1807 = vunpack.c.l.b16 %v1661
    %v1808 = vunpack.c.h.b16 %v1661
    %v1809 = vunpack.c.l.b16 %v1662
    %v1810 = vunpack.c.h.b16 %v1662
    %v1811 = vunpack.c.l.b16 %v1663
    %v1812 = vunpack.c.h.b16 %v1663
    %v1813 = vunpack.c.l.b16 %v1664
    %v1814 = vunpack.c.h.b16 %v1664
    %v1815 = vunpack.c.l.b16 %v1665
    %v1816 = vunpack.c.h.b16 %v1665
    %v1817 = vunpack.c.l.b16 %v1666
    %v1818 = vunpack.c.h.b16 %v1666
    %v1819 = vunpack.c.l.b16 %v1667
    %v1820 = vunpack.c.h.b16 %v1667
    %v1821 = vunpack.c.l.b16 %v1668
    %v1822 = vunpack.c.h.b16 %v1668
    %v1823 = vunpack.c.l.b16 %v1669
    %v1824 = vunpack.c.h.b16 %v1669
    %v1825 = vunpack.c.l.b16 %v1670
    %v1826 = vunpack.c.h.b16 %v1670
    %v1827 = vunpack.c.l.b16 %v1671
    %v1828 = vunpack.c.h.b16 %v1671
    %v1829 = vunpack.c.l.b16 %v1672
    %v1830 = vunpack.c.h.b16 %v1672
    %v1831 = vunpack.c.l.b16 %v1673
    %v1832 = vunpack.c.h.b16 %v1673
    %v1833 = vpack.c.b16 %v1737, %v1735
    %v1834 = vpack.c.b16 %v1738, %v1736
    %v1835 = vpack.c.b16 %v1741, %v1739
    %v1836 = vpack.c.b16 %v1742, %v1740
    %v1837 = vpack.c.b16 %v1745, %v1743
    %v1838 = vpack.c.b16 %v1746, %v1744
    %v1839 = vpack.c.b16 %v1749, %v1747
    %v1840 = vpack.c.b16 %v1750, %v1748
    %v1841 = vpack.c.b16 %v1753, %v1751
    %v1842 = vpack.c.b16 %v1754, %v1752
    %v1843 = vpack.c.b16 %v1757, %v1755
    %v1844 = vpack.c.b16 %v1758, %v1756
    %v1845 = vpack.c.b16 %v1761, %v1759
    %v1846 = vpack.c.b16 %v1762, %v1760
    %v1847 = vpack.c.b16 %v1765, %v1763
    %v1848 = vpack.c.b16 %v1766, %v1764
    %v1849 = vpack.c.b16 %v1769, %v1767
    %v1850 = vpack.c.b16 %v1770, %v1768
    %v1851 = vpack.c.b16 %v1773, %v1771
    %v1852 = vpack.c.b16 %v1774, %v1772
    %v1853 = vpack.c.b16 %v1777, %v1775
    %v1854 = vpack.c.b16 %v1778, %v1776
    %v1855 = vpack.c.b16 %v1781, %v1779
    %v1856 = vpack.c.b16 %v1782, %v1780
    %v1857 = vpack.c.b16 %v1785, %v1783
    %v1858 = vpack.c.b16 %v1786, %v1784
    %v1859 = vpack.c.b16 %v1789, %v1787
    %v1860 = vpack.c.b16 %v1790, %v1788
    %v1861 = vpack.c.b16 %v1793, %v1791
    %v1862 = vpack.c.b16 %v1794, %v1792
    %v1863 = vpack.c.b16 %v1797, %v1795
    %v1864 = vpack.c.b16 %v1798, %v1796
    %v1865 = vpack.c.b16 %v1801, %v1799
    %v1866 = vpack.c.b16 %v1802, %v1800
    %v1867 = vpack.c.b16 %v1805, %v1803
    %v1868 = vpack.c.b16 %v1806, %v1804
    %v1869 = vpack.c.b16 %v1809, %v1807
    %v1870 = vpack.c.b16 %v1810, %v1808
    %v1871 = vpack.c.b16 %v1813, %v1811
    %v1872 = vpack.c.b16 %v1814, %v1812
    %v1873 = vpack.c.b16 %v1817, %v1815
    %v1874 = vpack.c.b16 %v1818, %v1816
    %v1875 = vpack.c.b16 %v1821, %v1819
    %v1876 = vpack.c.b16 %v1822, %v1820
    %v1877 = vpack.c.b16 %v1825, %v1823
    %v1878 = vpack.c.b16 %v1826, %v1824
    %v1879 = vpack.c.b16 %v1829, %v1827
    %v1880 = vpack.c.b16 %v1830, %v1828
    %v1881 = vpack.c.b16 %v1831, %v1831
    %v1882 = vpack.c.b16 %v1832, %v1832
    %vm1931 = vcmask 64512
    %v1933 = vsel %vm1931, %v1624, 0
    %vm1935 = vcmask 1043456
    %v1937 = vsel %vm1935, %v1881, 0
    %v1940 = vsel %vm1935, %v1882, 0
    %1942 = vmatprep.subr.bf16.mxu0 %v1834
    %1943 = vmatpush1.bf16.msra.mxu0 %v1833
    %1944 = vmatprep.subr.bf16.mxu0 %v1836
    %1945 = vmatpush1.bf16.msra.mxu0 %v1835
    %1946 = vmatprep.subr.bf16.mxu0 %v1838
    %1947 = vmatpush1.bf16.msra.mxu0 %v1837
    %1948 = vmatprep.subr.bf16.mxu0 %v1840
    %1949 = vmatpush1.bf16.msra.mxu0 %v1839
    %1950 = vmatprep.subr.bf16.mxu0 %v1842
    %1951 = vmatpush1.bf16.msra.mxu0 %v1841
    %1952 = vmatprep.subr.bf16.mxu0 %v1844
    %1953 = vmatpush1.bf16.msra.mxu0 %v1843
    %1954 = vmatprep.subr.bf16.mxu0 %v1846
    %1955 = vmatpush1.bf16.msra.mxu0 %v1845
    %1956 = vmatprep.subr.bf16.mxu0 %v1848
    %1957 = vmatpush1.bf16.msra.mxu0 %v1847
    %1958 = vmatprep.subr.bf16.mxu0 %v1850
    %1959 = vmatpush1.bf16.msra.mxu0 %v1849
    %1960 = vmatprep.subr.bf16.mxu0 %v1852
    %1961 = vmatpush1.bf16.msra.mxu0 %v1851
    %1962 = vmatprep.subr.bf16.mxu0 %v1854
    %1963 = vmatpush1.bf16.msra.mxu0 %v1853
    %1964 = vmatprep.subr.bf16.mxu0 %v1856
    %1965 = vmatpush1.bf16.msra.mxu0 %v1855
    %1966 = vmatprep.subr.bf16.mxu0 %v1858
    %1967 = vmatpush1.bf16.msra.mxu0 %v1857
    %1968 = vmatprep.subr.bf16.mxu0 %v1860
    %1969 = vmatpush1.bf16.msra.mxu0 %v1859
    %1970 = vmatprep.subr.bf16.mxu0 %v1862
    %1971 = vmatpush1.bf16.msra.mxu0 %v1861
    %1972 = vmatprep.subr.bf16.mxu0 %v1864
    %1973 = vmatpush1.bf16.msra.mxu0 %v1863
    %1974 = vmatprep.mubr.bf16.mxu0 %v1620
    %1975 = vmatmul.mubr.bf16.gmra.mrb[0].mxu0 %v1618
    %v1976 = vpop.f32.mrb[0].mxu0
    %v1977 = vadd.f32 %v1679, %v1976
    %v1978 = vpop.f32.mrb[0].mxu0
    %v1979 = vadd.f32 %v1683, %v1978
    %v1980 = vpop.f32.mrb[0].mxu0
    %v1981 = vpop.f32.mrb[0].mxu0
    %1982 = vdwg.mxu0
    %1983 = vmatprep.subr.bf16.mxu0 %v1866
    %1984 = vmatpush1.bf16.msra.mxu0 %v1865
    %1985 = vmatprep.subr.bf16.mxu0 %v1868
    %1986 = vmatpush1.bf16.msra.mxu0 %v1867
    %1987 = vmatprep.subr.bf16.mxu0 %v1870
    %1988 = vmatpush1.bf16.msra.mxu0 %v1869
    %1989 = vmatprep.subr.bf16.mxu0 %v1872
    %1990 = vmatpush1.bf16.msra.mxu0 %v1871
    %1991 = vmatprep.subr.bf16.mxu0 %v1874
    %1992 = vmatpush1.bf16.msra.mxu0 %v1873
    %1993 = vmatprep.subr.bf16.mxu0 %v1876
    %1994 = vmatpush1.bf16.msra.mxu0 %v1875
    %1995 = vmatprep.subr.bf16.mxu0 %v1878
    %1996 = vmatpush1.bf16.msra.mxu0 %v1877
    %1997 = vmatprep.subr.bf16.mxu0 %v1880
    %1998 = vmatpush1.bf16.msra.mxu0 %v1879
    %1999 = vmatprep.subr.bf16.mxu0 %v1940
    %2000 = vmatpush1.bf16.msra.mxu0 %v1937
    %2001 = vmatprep.subr.bf16.mxu0 0
    %2002 = vmatpush1.bf16.msra.mxu0 0
    %2003 = vmatprep.subr.bf16.mxu0 0
    %2004 = vmatpush1.bf16.msra.mxu0 0
    %2005 = vmatprep.subr.bf16.mxu0 0
    %2006 = vmatpush1.bf16.msra.mxu0 0
    %2007 = vmatprep.subr.bf16.mxu0 0
    %2008 = vmatpush1.bf16.msra.mxu0 0
    %2009 = vmatprep.subr.bf16.mxu0 0
    %2010 = vmatpush1.bf16.msra.mxu0 0
    %2011 = vmatprep.subr.bf16.mxu0 0
    %2012 = vmatpush1.bf16.msra.mxu0 0
    %2013 = vmatprep.subr.bf16.mxu0 0
    %2014 = vmatpush1.bf16.msra.mxu0 0
    %2015 = vmatprep.mubr.bf16.mxu0 %v1933
    %2016 = vmatmul.mubr.bf16.gmra.mrb[0].mxu0 %v1622
    %v2017 = vpop.f32.mrb[0].mxu0
    %v2018 = vadd.f32 %v1977, %v2017
    %v2019 = vpop.f32.mrb[0].mxu0
    %v2020 = vadd.f32 %v1979, %v2019
    %v2021 = vpop.f32.mrb[0].mxu0
    %v2022 = vpop.f32.mrb[0].mxu0
    %2023 = vdwg.mxu0
    %v2024 = vpack.c.bf16 %v2018, %v2018
    %v2025 = vpack.c.bf16 %v2020, %v2020
    %v2026 = vxor.u32 %v2024, 2147516416
    %v2027 = vxor.u32 %v2025, 2147516416
    %v2029 = vmul.bf16 %v2026, 1069105081
    %v2030 = vpow.bf16.pop %v2029
    %v2032 = vmul.bf16 %v2027, 1069105081
    %v2033 = vpow.bf16.pop %v2032
    %v2034 = vadd.bf16 %v2030, 1065369472
    %v2035 = vadd.bf16 %v2033, 1065369472
    %v2036 = vrcp.bf16.pop %v2034
    %v2037 = vmul.bf16 1065369472, %v2036
    %v2038 = vrcp.bf16.pop %v2035
    %v2039 = vmul.bf16 1065369472, %v2038
    %v2040 = vld [vmem:[%s5] sm:$0xf]
    %v2041 = vld [vmem:[%s5 + $0x4] sm:$0xf]
    %v2042 = vld [vmem:[%s5 + $0x8] sm:$0xf]
    %v2043 = vld [vmem:[%s5 + $0xc] sm:$0xf]
    %v2044 = vld [vmem:[%s5 + $0x10] sm:$0xf]
    %v2045 = vld [vmem:[%s5 + $0x14] sm:$0xf]
    %v2046 = vld [vmem:[%s5 + $0x18] sm:$0xf]
    %v2047 = vld [vmem:[%s5 + $0x1c] sm:$0xf]
    %v2048 = vld [vmem:[%s5 + $0x20] sm:$0xf]
    %v2049 = vld [vmem:[%s5 + $0x24] sm:$0xf]
    %v2050 = vld [vmem:[%s5 + $0x28] sm:$0xf]
    %v2051 = vld [vmem:[%s5 + $0x2c] sm:$0xf]
    %v2052 = vld [vmem:[%s5 + $0x30] sm:$0xf]
    %v2053 = vld [vmem:[%s5 + $0x34] sm:$0xf]
    %v2054 = vld [vmem:[%s5 + $0x38] sm:$0xf]
    %v2055 = vld [vmem:[%s5 + $0x3c] sm:$0xf]
    %v2056 = vld [vmem:[%s5 + $0x40] sm:$0xf]
    %v2057 = vld [vmem:[%s5 + $0x44] sm:$0xf]
    %v2058 = vld [vmem:[%s5 + $0x48] sm:$0xf]
    %v2059 = vld [vmem:[%s5 + $0x4c] sm:$0xf]
    %v2060 = vld [vmem:[%s5 + $0x50] sm:$0xf]
    %v2061 = vld [vmem:[%s5 + $0x54] sm:$0xf]
    %v2062 = vld [vmem:[%s5 + $0x58] sm:$0xf]
    %v2063 = vld [vmem:[%s5 + $0x5c] sm:$0xf]
    %v2064 = vld [vmem:[%s5 + $0x60] sm:$0x3]
    %v2065 = vld [vmem:[%s6] sm:$0x1]
    %v2067 = vlaneseq
    %v2068 = vshrl.u32 %v2067, 7
    %v2069 = vsub.s32 0, %v2068
    %v2070 = vrot.slane %v2065, %v2069
    %v2097 = vunpack.c.l.b16 %v2040
    %v2098 = vunpack.c.l.b16 %v2041
    %v2099 = vunpack.c.l.b16 %v2042
    %v2100 = vunpack.c.l.b16 %v2043
    %v2101 = vunpack.c.l.b16 %v2044
    %v2102 = vunpack.c.l.b16 %v2045
    %v2103 = vunpack.c.l.b16 %v2046
    %v2104 = vunpack.c.l.b16 %v2047
    %v2105 = vunpack.c.l.b16 %v2048
    %v2106 = vunpack.c.l.b16 %v2049
    %v2107 = vunpack.c.l.b16 %v2050
    %v2108 = vunpack.c.l.b16 %v2051
    %v2109 = vunpack.c.l.b16 %v2052
    %v2110 = vunpack.c.l.b16 %v2053
    %v2111 = vunpack.c.l.b16 %v2054
    %v2112 = vunpack.c.l.b16 %v2055
    %v2113 = vunpack.c.l.b16 %v2056
    %v2114 = vunpack.c.l.b16 %v2057
    %v2115 = vunpack.c.l.b16 %v2058
    %v2116 = vunpack.c.l.b16 %v2059
    %v2117 = vunpack.c.l.b16 %v2060
    %v2118 = vunpack.c.l.b16 %v2061
    %v2119 = vunpack.c.l.b16 %v2062
    %v2120 = vunpack.c.l.b16 %v2063
    %v2121 = vunpack.c.l.b16 %v2064
    %v2122 = vpack.c.b16 %v2098, %v2097
    %v2123 = vpack.c.b16 %v2100, %v2099
    %v2124 = vpack.c.b16 %v2102, %v2101
    %v2125 = vpack.c.b16 %v2104, %v2103
    %v2126 = vpack.c.b16 %v2106, %v2105
    %v2127 = vpack.c.b16 %v2108, %v2107
    %v2128 = vpack.c.b16 %v2110, %v2109
    %v2129 = vpack.c.b16 %v2112, %v2111
    %v2130 = vpack.c.b16 %v2114, %v2113
    %v2131 = vpack.c.b16 %v2116, %v2115
    %v2132 = vpack.c.b16 %v2118, %v2117
    %v2133 = vpack.c.b16 %v2120, %v2119
    %v2134 = vpack.c.b16 %v2121, %v2121
    %vm2147 = vcmask 556032
    %v2149 = vsel %vm2147, %v2039, 0
    %vm2151 = vcmask 1041408
    %v2153 = vsel %vm2151, %v2134, 0
    %2155 = vmatprep.subr.bf16.mxu0 0
    %2156 = vmatpush1.bf16.msra.mxu0 %v2122
    %2157 = vmatprep.subr.bf16.mxu0 0
    %2158 = vmatpush1.bf16.msra.mxu0 %v2123
    %2159 = vmatprep.subr.bf16.mxu0 0
    %2160 = vmatpush1.bf16.msra.mxu0 %v2124
    %2161 = vmatprep.subr.bf16.mxu0 0
    %2162 = vmatpush1.bf16.msra.mxu0 %v2125
    %2163 = vmatprep.subr.bf16.mxu0 0
    %2164 = vmatpush1.bf16.msra.mxu0 %v2126
    %2165 = vmatprep.subr.bf16.mxu0 0
    %2166 = vmatpush1.bf16.msra.mxu0 %v2127
    %2167 = vmatprep.subr.bf16.mxu0 0
    %2168 = vmatpush1.bf16.msra.mxu0 %v2128
    %2169 = vmatprep.subr.bf16.mxu0 0
    %2170 = vmatpush1.bf16.msra.mxu0 %v2129
    %2171 = vmatprep.subr.bf16.mxu0 0
    %2172 = vmatpush1.bf16.msra.mxu0 %v2130
    %2173 = vmatprep.subr.bf16.mxu0 0
    %2174 = vmatpush1.bf16.msra.mxu0 %v2131
    %2175 = vmatprep.subr.bf16.mxu0 0
    %2176 = vmatpush1.bf16.msra.mxu0 %v2132
    %2177 = vmatprep.subr.bf16.mxu0 0
    %2178 = vmatpush1.bf16.msra.mxu0 %v2133
    %2179 = vmatprep.subr.bf16.mxu0 0
    %2180 = vmatpush1.bf16.msra.mxu0 %v2153
    %2181 = vmatprep.subr.bf16.mxu0 0
    %2182 = vmatpush1.bf16.msra.mxu0 0
    %2183 = vmatprep.subr.bf16.mxu0 0
    %2184 = vmatpush1.bf16.msra.mxu0 0
    %2185 = vmatprep.subr.bf16.mxu0 0
    %2186 = vmatpush1.bf16.msra.mxu0 0
    %2187 = vmatprep.mubr.bf16.mxu0 %v2149
    %2188 = vmatmul.mubr.bf16.gmra.mrb[0].mxu0 %v2037
    %v2189 = vpop.f32.mrb[0].mxu0
    %v2190 = vadd.f32 %v2070, %v2189
    %v2191 = vpop.f32.mrb[0].mxu0
    %v2192 = vpop.f32.mrb[0].mxu0
    %v2193 = vpop.f32.mrb[0].mxu0
    %2194 = vdwg.mxu0
    %v2195 = vpack.c.bf16 %v2190, %v2190
    %v2196 = vxor.u32 %v2195, 2147516416
    %v2198 = vmul.bf16 %v2196, 1069105081
    %v2199 = vpow.bf16.pop %v2198
    %v2200 = vadd.bf16 %v2199, 1065369472
    %v2201 = vrcp.bf16.pop %v2200
    %v2202 = vmul.bf16 1065369472, %v2201
    %v2203 = vld [vmem:[%s7] sm:$0xf]
    %v2204 = vld [vmem:[%s7 + $0x4] sm:$0xf]
    %v2205 = vld [vmem:[%s7 + $0x8] sm:$0xf]
    %v2206 = vld [vmem:[%s7 + $0xc] sm:$0xf]
    %v2207 = vld [vmem:[%s7 + $0x10] sm:$0xf]
    %v2208 = vld [vmem:[%s7 + $0x14] sm:$0xf]
    %v2209 = vld [vmem:[%s7 + $0x18] sm:$0xf]
    %v2210 = vld [vmem:[%s7 + $0x1c] sm:$0xf]
    %v2211 = vld [vmem:[%s7 + $0x20] sm:$0xf]
    %v2212 = vld [vmem:[%s7 + $0x24] sm:$0xf]
    %v2213 = vld [vmem:[%s7 + $0x28] sm:$0xf]
    %v2214 = vld [vmem:[%s7 + $0x2c] sm:$0xf]
    %v2215 = vld [vmem:[%s7 + $0x30] sm:$0x1]
    %v2216 = vld [vmem:[%s8] sm:$0x1]
    %v2218 = vlaneseq
    %v2219 = vshrl.u32 %v2218, 7
    %v2220 = vsub.s32 0, %v2219
    %v2221 = vrot.slane %v2216, %v2220
    %v2236 = vunpack.c.l.b16 %v2203
    %v2237 = vunpack.c.l.b16 %v2204
    %v2238 = vunpack.c.l.b16 %v2205
    %v2239 = vunpack.c.l.b16 %v2206
    %v2240 = vunpack.c.l.b16 %v2207
    %v2241 = vunpack.c.l.b16 %v2208
    %v2242 = vunpack.c.l.b16 %v2209
    %v2243 = vunpack.c.l.b16 %v2210
    %v2244 = vunpack.c.l.b16 %v2211
    %v2245 = vunpack.c.l.b16 %v2212
    %v2246 = vunpack.c.l.b16 %v2213
    %v2247 = vunpack.c.l.b16 %v2214
    %v2248 = vunpack.c.l.b16 %v2215
    %v2249 = vpack.c.b16 %v2237, %v2236
    %v2250 = vpack.c.b16 %v2239, %v2238
    %v2251 = vpack.c.b16 %v2241, %v2240
    %v2252 = vpack.c.b16 %v2243, %v2242
    %v2253 = vpack.c.b16 %v2245, %v2244
    %v2254 = vpack.c.b16 %v2247, %v2246
    %v2255 = vpack.c.b16 %v2248, %v2248
    %vm2262 = vcmask 801792
    %v2264 = vsel %vm2262, %v2202, 0
    %vm2266 = vcmask 1040384
    %v2268 = vsel %vm2266, %v2255, 0
    %2270 = vmatprep.subr.bf16.mxu0 0
    %2271 = vmatpush1.bf16.msra.mxu0 %v2249
    %2272 = vmatprep.subr.bf16.mxu0 0
    %2273 = vmatpush1.bf16.msra.mxu0 %v2250
    %2274 = vmatprep.subr.bf16.mxu0 0
    %2275 = vmatpush1.bf16.msra.mxu0 %v2251
    %2276 = vmatprep.subr.bf16.mxu0 0
    %2277 = vmatpush1.bf16.msra.mxu0 %v2252
    %2278 = vmatprep.subr.bf16.mxu0 0
    %2279 = vmatpush1.bf16.msra.mxu0 %v2253
    %2280 = vmatprep.subr.bf16.mxu0 0
    %2281 = vmatpush1.bf16.msra.mxu0 %v2254
    %2282 = vmatprep.subr.bf16.mxu0 0
    %2283 = vmatpush1.bf16.msra.mxu0 %v2268
    %2284 = vmatprep.subr.bf16.mxu0 0
    %2285 = vmatpush1.bf16.msra.mxu0 0
    %2286 = vmatprep.subr.bf16.mxu0 0
    %2287 = vmatpush1.bf16.msra.mxu0 0
    %2288 = vmatprep.subr.bf16.mxu0 0
    %2289 = vmatpush1.bf16.msra.mxu0 0
    %2290 = vmatprep.subr.bf16.mxu0 0
    %2291 = vmatpush1.bf16.msra.mxu0 0
    %2292 = vmatprep.subr.bf16.mxu0 0
    %2293 = vmatpush1.bf16.msra.mxu0 0
    %2294 = vmatprep.subr.bf16.mxu0 0
    %2295 = vmatpush1.bf16.msra.mxu0 0
    %2296 = vmatprep.subr.bf16.mxu0 0
    %2297 = vmatpush1.bf16.msra.mxu0 0
    %2298 = vmatprep.subr.bf16.mxu0 0
    %2299 = vmatpush1.bf16.msra.mxu0 0
    %2300 = vmatprep.subr.bf16.mxu0 0
    %2301 = vmatpush1.bf16.msra.mxu0 0
    %2302 = vmatprep.mubr.bf16.mxu0 0
    %2303 = vmatmul.mubr.bf16.gmra.mrb[0].mxu0 %v2264
    %v2304 = vpop.f32.mrb[0].mxu0
    %v2305 = vadd.f32 %v2221, %v2304
    %v2306 = vpop.f32.mrb[0].mxu0
    %v2307 = vpop.f32.mrb[0].mxu0
    %v2308 = vpop.f32.mrb[0].mxu0
    %2309 = vdwg.mxu0
    %2310 = vmax.xlane.f32.xlu0 %v2305
    %v2311 = vpop.xlane.xlu0 %2310
    %v2312 = vsub.f32 %v2305, %v2311
    %v2313 = vmul.f32 %v2312, 1.442695
    %v2314 = vpow.pop %v2313
    %2315 = vadd.xlane.f32.xlu0 %v2314
    %v2316 = vpop.xlane.xlu0 %2315
    %v2317 = vrcp.pop %v2316
    %v2318 = vmul.f32 1.0, %v2317
    %v2319 = vmul.f32 %v2314, %v2318
    %2320 = vst [vmem:[#allocation2] sm:$0xff] %v2319
    // Predicated region
    $region38: #{tpu_custom_call.1} parent=1 // pred_check
      _
    $region39: #{tpu_custom_call.1} parent=1 // pred_check_branch
      %2322 = sbr.rel (0) target = $region41
    $region40: #{tpu_custom_call.1} parent=1 // pred_region
      %s2324 = ssub.s32 128, 128
      %2325 = vsyncadd [#allocation3], %s2324
      %s2327 = sshll.u32 [#allocation2], 4
      %s2328 = int_to_ptr.vmem [resolvable:$true] %s2327
      %2330 = dma.vmem_to_hbm [thread:$0]  %s2328, 128, %s9, [#allocation3]
    $region41: #{tpu_custom_call.1} parent=1 // pred_fallthru
      _
    // Predicated region
    $region42: #{tpu_custom_call.1} parent=1 // pred_check
      _
    $region43: #{tpu_custom_call.1} parent=1 // pred_check_branch
      %2332 = sbr.rel (0) target = $region45
    $region44: #{tpu_custom_call.1} parent=1 // pred_region
      %2333 = dma.done [#allocation3], 128
    $region45: #{tpu_custom_call.1} parent=1 // pred_fallthru
      _
    %2334 = vsyncpa [#allocation3], 1

</llo_original>
